<compile_context>
chip_gen: v6e
topology: v6e:2x2x1
jax: 0.10.0
libtpu: 0.0.40
codegen_flags: <defaults>
</compile_context>

<pallas_src>
import jax
import jax.numpy as jnp
from jax import lax
from jax.experimental import pallas as pl
from jax.experimental.pallas import tpu as pltpu

HIDDEN = 64          # hidden_feats
READOUT = 1024       # readout_feats
PRED_HIDDEN = 512    # predict_hidden_feats
NUM_MP_STEPS = 3     # num_step_message_passing
NUM_S2S_ITERS = 3    # num_step_set2set


def _vmem():
    return pl.BlockSpec(memory_space=pltpu.MemorySpace.VMEM)


def _smem():
    return pl.BlockSpec(memory_space=pltpu.MemorySpace.SMEM)


# ----------------------------- Pallas kernels ------------------------------

def _mpnn_fused_kernel(nf_ref, ef_ref, src1h_ref, dst1h_ref, g1h_ref, g1ht_ref,
                       proj_w_ref, proj_b_ref, wstack_ref, conv_b_ref,
                       gru_wrz_ref, gru_brz_ref, gru_wn_ref, gru_bn_ref,
                       lstm_wih_ref, lstm_whh_ref, lstm_b_ref,
                       qstar_ref):
    H = HIDDEN
    f32 = jnp.float32
    bf16 = jnp.bfloat16
    C = ef_ref.shape[1]            # edge_in_feats

    def mm(a, b):
        return jnp.dot(a, b, preferred_element_type=f32)

    # ---- project_node_feats: Linear + ReLU ----
    h0 = jnp.maximum(mm(nf_ref[...], proj_w_ref[...]) + proj_b_ref[...], 0.0)   # (N, H)

    src1h = src1h_ref[...]          # (E, N) bf16 gather matrix
    dst1h = dst1h_ref[...]          # (N, E) bf16 scatter-add matrix
    ef = ef_ref[...]                # (E, C) f32 edge features
    wstack = wstack_ref[...]        # (H, (C+1)*H) bf16: [edge_bias | W_c for each edge channel]
    conv_b = conv_b_ref[...]
    gru_wrz = gru_wrz_ref[...]
    gru_brz = gru_brz_ref[...]
    gru_wn = gru_wn_ref[...]
    gru_bn = gru_bn_ref[...]

    # ---- message passing (fused NNConv + GRU), state never leaves VMEM ----
    # NNConv message re-associated:
    #   msgs[e,:] = h_src[e,:] @ (edge_b_r + sum_c ef[e,c] * edge_w_r[c])
    #             = (h_src @ edge_b_r)[e,:] + sum_c ef[e,c] * (h_src @ edge_w_r[c])[e,:]
    # so W_e never materializes; everything is one MXU matmul against W_stack.
    def mp_step(_, h):
        h_src = mm(src1h, h.astype(bf16))                        # (E, H) gather (MXU)
        t = mm(h_src.astype(bf16), wstack)                       # (E, (C+1)*H) (MXU)
        msgs = t[:, 0:H]                                         # edge-network bias term
        for c in range(C):
            msgs = msgs + ef[:, c:c + 1] * t[:, (c + 1) * H:(c + 2) * H]
        agg = jnp.maximum(mm(dst1h, msgs.astype(bf16)) + conv_b, 0.0)   # (N, H) sum-agg + bias + ReLU
        # GRU cell, r/z gates packed as one K=128 matmul on [m | h]; n gate via
        # block-diagonal weight so [gi_n | gh_n] comes from one K=128 matmul too.
        mh = jnp.concatenate([agg, h], axis=1)                   # (N, 2H)
        g_rz = mm(mh, gru_wrz) + gru_brz                         # (N, 2H)
        r = jax.nn.sigmoid(g_rz[:, 0:H])
        z = jax.nn.sigmoid(g_rz[:, H:2 * H])
        g_n = mm(mh, gru_wn) + gru_bn                            # (N, 2H) = [gi_n | gh_n]
        n = jnp.tanh(g_n[:, 0:H] + r * g_n[:, H:2 * H])
        return (1.0 - z) * n + z * h

    h = lax.fori_loop(0, NUM_MP_STEPS, mp_step, h0)

    feat = jnp.concatenate([h0, h], axis=1)                      # (N, 2H) lane-dense (128)
    feat_b = feat.astype(bf16)

    # ---- Set2Set readout: LSTM + attention + per-graph softmax + pooling ----
    g1h = g1h_ref[...]                                           # (G, N) bf16
    g1ht = g1ht_ref[...]                                         # (N, G) bf16
    g1ht_f = g1ht.astype(f32)                                    # (N, G)
    node_mask = g1ht_f > 0.0                                     # (N, G)
    G = g1h.shape[0]
    lstm_wih = lstm_wih_ref[...]
    lstm_whh = lstm_whh_ref[...]
    lstm_b = lstm_b_ref[...]

    def s2s_step(_, carry):
        q_star, hh, cc = carry
        # LSTM cell, packed gates [i | f | g | o] (128-aligned slices).
        g = mm(q_star, lstm_wih) + mm(hh, lstm_whh) + lstm_b     # (G, 8H)
        i = jax.nn.sigmoid(g[:, 0:2 * H])
        f = jax.nn.sigmoid(g[:, 2 * H:4 * H])
        gg = jnp.tanh(g[:, 4 * H:6 * H])
        o = jax.nn.sigmoid(g[:, 6 * H:8 * H])
        cc2 = f * cc + i * gg
        hh2 = o * jnp.tanh(cc2)
        q = hh2                                                  # (G, 2H)

        qn = mm(g1ht, q.astype(bf16))                            # (N, 2H) broadcast_nodes
        e = jnp.sum(feat * qn, axis=-1, keepdims=True)           # (N, 1) attention logits
        # per-graph softmax over nodes with a true PER-GRAPH max (masked reduce).
        e_ng = jnp.where(node_mask, e, -1e30)                    # (N, G)
        gmax = jnp.max(e_ng, axis=0, keepdims=True)              # (1, G)
        max_n = jnp.sum(g1ht_f * gmax, axis=1, keepdims=True)    # (N, 1) broadcast back to nodes
        ex = jnp.exp(e - max_n)                                  # (N, 1)
        gsum = jnp.sum(g1ht_f * ex, axis=0, keepdims=True)       # (1, G) per-graph sums
        sum_n = jnp.sum(g1ht_f * gsum, axis=1, keepdims=True)    # (N, 1)
        alpha = ex * pl.reciprocal(sum_n, approx=True)           # (N, 1)
        readout = mm(g1h, (feat * alpha).astype(bf16))           # (G, 2H) weighted sum_nodes
        q_star2 = jnp.concatenate([q, readout], axis=1)          # (G, 4H)
        return (q_star2, hh2, cc2)

    q_star0 = jnp.zeros((G, 4 * H), f32)
    hh0 = jnp.zeros((G, 2 * H), f32)
    cc0 = jnp.zeros((G, 2 * H), f32)
    q_star, _, _ = lax.fori_loop(0, NUM_S2S_ITERS, s2s_step, (q_star0, hh0, cc0))
    qstar_ref[...] = q_star


def _readout_predict_kernel(qstar_ref, rsel_ref, psel_ref,
                            sp_w_ref, sp_b_ref, sp_a_ref,
                            w1_ref, b1_ref, a1_ref,
                            w2_ref, b2_ref, a2_ref,
                            w3_ref, b3_ref, o_ref):
    f32 = jnp.float32
    bf16 = jnp.bfloat16

    def mm(a, b):
        return jnp.dot(a, b, preferred_element_type=f32)

    def prelu(y, a):
        return jnp.where(y > 0.0, y, a * y)

    # sparsify: Linear(4H -> READOUT) + PReLU, per graph (bf16 matmul, f32 accumulate)
    sp = prelu(mm(qstar_ref[...].astype(bf16), sp_w_ref[...]) + sp_b_ref[...],
               sp_a_ref[0, 0])                                   # (G, READOUT)
    # sum MPNN graph features over reactant / product molecules (selection matmuls, exact 0/1)
    r_feats = mm(rsel_ref[...], sp)                              # (B, READOUT)
    p_feats = mm(psel_ref[...], sp)                              # (B, READOUT)
    x = jnp.concatenate([r_feats, p_feats], axis=1)              # (B, 2*READOUT)
    # TODO(synk): nn.Dropout layers treated as identity (inference mode).
    h1 = prelu(mm(x.astype(bf16), w1_ref[...]) + b1_ref[...], a1_ref[0, 0])
    h2 = prelu(mm(h1.astype(bf16), w2_ref[...]) + b2_ref[...], a2_ref[0, 0])
    o_ref[...] = mm(h2, w3_ref[...]) + b3_ref[...]


# ----------------------------- Pallas wrappers ------------------------------

def mpnn_qstar(nf, ef, src1h, dst1h, g1h, g1ht, kp):
    G = g1h.shape[0]
    return pl.pallas_call(
        _mpnn_fused_kernel,
        out_shape=jax.ShapeDtypeStruct((G, 4 * HIDDEN), jnp.float32),
        in_specs=[_vmem()] * 17,
        out_specs=_vmem(),
        compiler_params=pltpu.CompilerParams(vmem_limit_bytes=64 * 1024 * 1024),
    )(nf, ef, src1h, dst1h, g1h, g1ht,
      kp["proj_w"], kp["proj_b"], kp["w_stack"], kp["nnconv_b"],
      kp["gru_wrz"], kp["gru_brz"], kp["gru_wn"], kp["gru_bn"],
      kp["lstm_wih"], kp["lstm_whh"], kp["lstm_b"])


def readout_predict(q_star, r_sel, p_sel, kp):
    B = r_sel.shape[0]
    return pl.pallas_call(
        _readout_predict_kernel,
        out_shape=jax.ShapeDtypeStruct((B, 2), jnp.float32),
        in_specs=([_vmem()] * 5 + [_smem()] + [_vmem()] * 2 + [_smem()]
                  + [_vmem()] * 2 + [_smem()] + [_vmem()] * 2),
        out_specs=_vmem(),
        compiler_params=pltpu.CompilerParams(vmem_limit_bytes=64 * 1024 * 1024),
    )(q_star, r_sel, p_sel,
      kp["sp_w"], kp["sp_b"], kp["sp_a"],
      kp["w1"], kp["b1"], kp["a1"],
      kp["w2"], kp["b2"], kp["a2"],
      kp["w3"], kp["b3"])


# ----------------------------- parameters -----------------------------------

def _init_linear(key, fan_in, fan_out):
    kw, kb = jax.random.split(key)
    bound = 1.0 / (fan_in ** 0.5)
    w = jax.random.uniform(kw, (fan_in, fan_out), jnp.float32, -bound, bound)
    b = jax.random.uniform(kb, (1, fan_out), jnp.float32, -bound, bound)
    return w, b


def init_mpnn_params(key, node_in, edge_in, hidden=HIDDEN, readout_feats=READOUT):
    keys = jax.random.split(key, 11)
    proj_w, proj_b = _init_linear(keys[0], node_in, hidden)
    edge_w, edge_b = _init_linear(keys[1], edge_in, hidden * hidden)
    nnconv_b = jax.random.uniform(keys[2], (1, hidden), jnp.float32, -0.1, 0.1)

    # GRU, gate order [r | z | n]; weights stored (in, out)
    gb = 1.0 / (hidden ** 0.5)
    gru_wi = jax.random.uniform(keys[3], (hidden, 3 * hidden), jnp.float32, -gb, gb)
    gru_wh = jax.random.uniform(keys[4], (hidden, 3 * hidden), jnp.float32, -gb, gb)
    gru_bi = jax.random.uniform(keys[5], (1, 3 * hidden), jnp.float32, -gb, gb)
    gru_bh = jax.random.uniform(keys[6], (1, 3 * hidden), jnp.float32, -gb, gb)

    # Set2Set LSTM: input_size = 4H (= 2*input_dim), hidden_size = 2H, gates [i|f|g|o]
    lb = 1.0 / ((2 * hidden) ** 0.5)
    lstm_wih = jax.random.uniform(keys[7], (4 * hidden, 8 * hidden), jnp.float32, -lb, lb)
    lstm_whh = jax.random.uniform(keys[8], (2 * hidden, 8 * hidden), jnp.float32, -lb, lb)
    lstm_b = jax.random.uniform(keys[9], (1, 8 * hidden), jnp.float32, -lb, lb)

    sp_w, sp_b = _init_linear(keys[10], 4 * hidden, readout_feats)
    sp_a = jnp.full((1, 1), 0.25, jnp.float32)   # PReLU init

    return dict(proj_w=proj_w, proj_b=proj_b, edge_w=edge_w, edge_b=edge_b,
                nnconv_b=nnconv_b,
                gru_wi=gru_wi, gru_wh=gru_wh, gru_bi=gru_bi, gru_bh=gru_bh,
                lstm_wih=lstm_wih, lstm_whh=lstm_whh, lstm_b=lstm_b,
                sp_w=sp_w, sp_b=sp_b, sp_a=sp_a)


def init_reaction_params(key, node_in, edge_in,
                         readout_feats=READOUT, predict_hidden=PRED_HIDDEN):
    k = jax.random.split(key, 4)
    mpnn = init_mpnn_params(k[0], node_in, edge_in, readout_feats=readout_feats)
    w1, b1 = _init_linear(k[1], readout_feats * 2, predict_hidden)
    w2, b2 = _init_linear(k[2], predict_hidden, predict_hidden)
    w3, b3 = _init_linear(k[3], predict_hidden, 2)
    a = jnp.full((1, 1), 0.25, jnp.float32)
    return dict(mpnn=mpnn, w1=w1, b1=b1, a1=a, w2=w2, b2=b2, a2=a, w3=w3, b3=b3)


def pack_params(params):
    """Build kernel-ready (packed / bf16-cast) weights from torch-layout params."""
    H = HIDDEN
    bf16 = jnp.bfloat16
    mp = params["mpnn"]
    C = mp["edge_w"].shape[0]

    # NNConv edge-network stacked weight: [edge_bias_r | edge_w_r[0] | ... | edge_w_r[C-1]]
    edge_w_r = mp["edge_w"].reshape(C, H, H)       # (C, H_in, H_out) — matches .view(-1, in, out)
    edge_b_r = mp["edge_b"].reshape(H, H)          # (H_in, H_out)
    w_stack = jnp.concatenate([edge_b_r] + [edge_w_r[c] for c in range(C)],
                              axis=1).astype(bf16)                           # (H, (C+1)*H)

    # GRU packing: r/z on [m|h] (K=128), n-gate via block-diagonal (K=128)
    wi, wh, bi, bh = mp["gru_wi"], mp["gru_wh"], mp["gru_bi"], mp["gru_bh"]
    wi_r, wi_z, wi_n = wi[:, 0:H], wi[:, H:2 * H], wi[:, 2 * H:3 * H]
    wh_r, wh_z, wh_n = wh[:, 0:H], wh[:, H:2 * H], wh[:, 2 * H:3 * H]
    gru_wrz = jnp.concatenate([jnp.concatenate([wi_r, wi_z], axis=1),
                               jnp.concatenate([wh_r, wh_z], axis=1)], axis=0)   # (2H, 2H)
    gru_brz = jnp.concatenate([bi[:, 0:H] + bh[:, 0:H],
                               bi[:, H:2 * H] + bh[:, H:2 * H]], axis=1)         # (1, 2H)
    zeros = jnp.zeros((H, H), jnp.float32)
    gru_wn = jnp.concatenate([jnp.concatenate([wi_n, zeros], axis=1),
                              jnp.concatenate([zeros, wh_n], axis=1)], axis=0)   # (2H, 2H)
    gru_bn = jnp.concatenate([bi[:, 2 * H:3 * H], bh[:, 2 * H:3 * H]], axis=1)   # (1, 2H)

    kp_mpnn = dict(proj_w=mp["proj_w"], proj_b=mp["proj_b"], w_stack=w_stack,
                   nnconv_b=mp["nnconv_b"],
                   gru_wrz=gru_wrz, gru_brz=gru_brz, gru_wn=gru_wn, gru_bn=gru_bn,
                   lstm_wih=mp["lstm_wih"], lstm_whh=mp["lstm_whh"], lstm_b=mp["lstm_b"])
    kp_head = dict(sp_w=mp["sp_w"].astype(bf16), sp_b=mp["sp_b"], sp_a=mp["sp_a"],
                   w1=params["w1"].astype(bf16), b1=params["b1"], a1=params["a1"],
                   w2=params["w2"].astype(bf16), b2=params["b2"], a2=params["a2"],
                   w3=params["w3"], b3=params["b3"])
    return kp_mpnn, kp_head


# ----------------------------- model forward --------------------------------

def batch_graphs(mols):
    """Disjoint union of a list of batched graphs."""
    node_feats = jnp.concatenate([g["node_feats"] for g in mols], axis=0)
    edge_feats = jnp.concatenate([g["edge_feats"] for g in mols], axis=0)
    srcs, dsts, ngids = [], [], []
    node_off, graph_off = 0, 0
    for g in mols:
        srcs.append(g["src"] + node_off)
        dsts.append(g["dst"] + node_off)
        ngids.append(g["node_graph"] + graph_off)
        node_off += g["node_feats"].shape[0]
        graph_off += g["num_graphs"]
    return dict(node_feats=node_feats, edge_feats=edge_feats,
                src=jnp.concatenate(srcs), dst=jnp.concatenate(dsts),
                node_graph=jnp.concatenate(ngids), num_graphs=graph_off)


def reaction_mpnn_forward(params, rmols, pmols):
    B = rmols[0]["num_graphs"]
    assert all(m["num_graphs"] == B for m in list(rmols) + list(pmols)), \
        "all molecule batches must share the same number of graphs"
    n_r = len(rmols)

    # One disjoint-union graph for every reactant + product molecule -> whole MPNN
    # runs as a single fused pallas_call.
    g = batch_graphs(list(rmols) + list(pmols))
    N = g["node_feats"].shape[0]
    G = g["num_graphs"]

    # one-hot gather / scatter / readout matrices — bf16 is exact for 0/1 values
    src1h = jax.nn.one_hot(g["src"], N, dtype=jnp.bfloat16)          # (E, N)
    dst1h = jax.nn.one_hot(g["dst"], N, dtype=jnp.bfloat16).T        # (N, E)
    g1ht = jax.nn.one_hot(g["node_graph"], G, dtype=jnp.bfloat16)    # (N, G)
    g1h = g1ht.T                                                     # (G, N)

    kp_mpnn, kp_head = pack_params(params)

    q_star = mpnn_qstar(g["node_feats"], g["edge_feats"],
                        src1h, dst1h, g1h, g1ht, kp_mpnn)            # (G, 4H)

    # selection matrices summing per-graph features over reactant / product molecules
    gidx = jnp.arange(G)
    bidx = jnp.arange(B)
    same_b = (gidx[None, :] % B) == bidx[:, None]
    r_sel = jnp.where(same_b & (gidx[None, :] < n_r * B), 1.0, 0.0).astype(jnp.float32)
    p_sel = jnp.where(same_b & (gidx[None, :] >= n_r * B), 1.0, 0.0).astype(jnp.float32)

    out = readout_predict(q_star, r_sel, p_sel, kp_head)             # (B, 2)
    return out[:, 0], out[:, 1]


# ----------------------------- synthetic graphs -----------------------------

def make_graph(key, num_graphs, nodes_per_graph, node_in, edge_in):
    kn, ke = jax.random.split(key)
    N = num_graphs * nodes_per_graph
    node_feats = jax.random.uniform(kn, (N, node_in), jnp.float32, -1.0, 1.0)
    src_list, dst_list = [], []
    for gi in range(num_graphs):
        base = gi * nodes_per_graph
        for v in range(nodes_per_graph):
            u = base + v
            w = base + (v + 1) % nodes_per_graph
            src_list += [u, w]
            dst_list += [w, u]
    src = jnp.array(src_list, jnp.int32)
    dst = jnp.array(dst_list, jnp.int32)
    E = src.shape[0]
    edge_feats = jax.random.uniform(ke, (E, edge_in), jnp.float32, -1.0, 1.0)
    node_graph = jnp.repeat(jnp.arange(num_graphs, dtype=jnp.int32), nodes_per_graph)
    return dict(node_feats=node_feats, edge_feats=edge_feats, src=src, dst=dst,
                node_graph=node_graph, num_graphs=num_graphs)


# ----------------------------- main ------------------------------------------

if __name__ == "__main__":
    key = jax.random.PRNGKey(0)
    node_in, edge_in = 16, 8
    k_params, k_graphs = jax.random.split(key)

    params = init_reaction_params(k_params, node_in, edge_in)

    gkeys = jax.random.split(k_graphs, 4)
    # 2 reactant mols + 2 product mols; each a batched graph with 2 graphs x 4 nodes.
    rmols = [make_graph(gkeys[0], 2, 4, node_in, edge_in),
             make_graph(gkeys[1], 2, 4, node_in, edge_in)]
    pmols = [make_graph(gkeys[2], 2, 4, node_in, edge_in),
             make_graph(gkeys[3], 2, 4, node_in, edge_in)]

    y0, y1 = reaction_mpnn_forward(params, rmols, pmols)
    jax.block_until_ready((y0, y1))

    assert y0.shape == (2,) and y1.shape == (2,)
    assert bool(jnp.all(jnp.isfinite(y0))) and bool(jnp.all(jnp.isfinite(y1)))
    print("KERNEL_OK")
</pallas_src>

<mosaic_0001>
module attributes {stable_mosaic.version = 11 : i64} {
  func.func @_mpnn_fused_kernel(%arg0: memref<32x16xf32, #tpu.memory_space<vmem>>, %arg1: memref<64x8xf32, #tpu.memory_space<vmem>>, %arg2: memref<64x32xbf16, #tpu.memory_space<vmem>>, %arg3: memref<32x64xbf16, #tpu.memory_space<vmem>>, %arg4: memref<8x32xbf16, #tpu.memory_space<vmem>>, %arg5: memref<32x8xbf16, #tpu.memory_space<vmem>>, %arg6: memref<16x64xf32, #tpu.memory_space<vmem>>, %arg7: memref<1x64xf32, #tpu.memory_space<vmem>>, %arg8: memref<64x576xbf16, #tpu.memory_space<vmem>>, %arg9: memref<1x64xf32, #tpu.memory_space<vmem>>, %arg10: memref<128x128xf32, #tpu.memory_space<vmem>>, %arg11: memref<1x128xf32, #tpu.memory_space<vmem>>, %arg12: memref<128x128xf32, #tpu.memory_space<vmem>>, %arg13: memref<1x128xf32, #tpu.memory_space<vmem>>, %arg14: memref<256x512xf32, #tpu.memory_space<vmem>>, %arg15: memref<128x512xf32, #tpu.memory_space<vmem>>, %arg16: memref<1x512xf32, #tpu.memory_space<vmem>>, %arg17: memref<8x256xf32, #tpu.memory_space<vmem>>) attributes {dimension_semantics = [], scalar_prefetch = 0 : i64, scratch_operands = 0 : i64, tpu.core_type = #tpu.core_type<tc>} {
    %c0 = arith.constant 0 : index
    %c0_0 = arith.constant 0 : index
    %0 = vector.load %arg0[%c0, %c0_0] : memref<32x16xf32, #tpu.memory_space<vmem>>, vector<32x16xf32>
    %c0_1 = arith.constant 0 : index
    %c0_2 = arith.constant 0 : index
    %1 = vector.load %arg6[%c0_1, %c0_2] : memref<16x64xf32, #tpu.memory_space<vmem>>, vector<16x64xf32>
    %cst = arith.constant dense<0.000000e+00> : vector<32x64xf32>
    %2 = tpu.matmul %0, %1, %cst {dimension_numbers = #tpu.dot_dimension_numbers<[1], [0], [0], [1], [0, 0, 1, 1], [], []>} : vector<32x16xf32>, vector<16x64xf32>, vector<32x64xf32> -> vector<32x64xf32>
    %c0_3 = arith.constant 0 : index
    %c0_4 = arith.constant 0 : index
    %3 = vector.load %arg7[%c0_3, %c0_4] : memref<1x64xf32, #tpu.memory_space<vmem>>, vector<1x64xf32>
    %4 = vector.broadcast %3 : vector<1x64xf32> to vector<32x64xf32>
    %5 = arith.addf %2, %4 : vector<32x64xf32>
    %cst_5 = arith.constant 0.000000e+00 : f32
    %6 = vector.broadcast %cst_5 : f32 to vector<32x64xf32>
    %7 = arith.maximumf %5, %6 : vector<32x64xf32>
    %c0_6 = arith.constant 0 : index
    %c0_7 = arith.constant 0 : index
    %8 = vector.load %arg2[%c0_6, %c0_7] : memref<64x32xbf16, #tpu.memory_space<vmem>>, vector<64x32xbf16>
    %c0_8 = arith.constant 0 : index
    %c0_9 = arith.constant 0 : index
    %9 = vector.load %arg3[%c0_8, %c0_9] : memref<32x64xbf16, #tpu.memory_space<vmem>>, vector<32x64xbf16>
    %c0_10 = arith.constant 0 : index
    %c0_11 = arith.constant 0 : index
    %10 = vector.load %arg1[%c0_10, %c0_11] : memref<64x8xf32, #tpu.memory_space<vmem>>, vector<64x8xf32>
    %c0_12 = arith.constant 0 : index
    %c0_13 = arith.constant 0 : index
    %11 = vector.load %arg8[%c0_12, %c0_13] : memref<64x576xbf16, #tpu.memory_space<vmem>>, vector<64x576xbf16>
    %c0_14 = arith.constant 0 : index
    %c0_15 = arith.constant 0 : index
    %12 = vector.load %arg9[%c0_14, %c0_15] : memref<1x64xf32, #tpu.memory_space<vmem>>, vector<1x64xf32>
    %c0_16 = arith.constant 0 : index
    %c0_17 = arith.constant 0 : index
    %13 = vector.load %arg10[%c0_16, %c0_17] : memref<128x128xf32, #tpu.memory_space<vmem>>, vector<128x128xf32>
    %c0_18 = arith.constant 0 : index
    %c0_19 = arith.constant 0 : index
    %14 = vector.load %arg11[%c0_18, %c0_19] : memref<1x128xf32, #tpu.memory_space<vmem>>, vector<1x128xf32>
    %c0_20 = arith.constant 0 : index
    %c0_21 = arith.constant 0 : index
    %15 = vector.load %arg12[%c0_20, %c0_21] : memref<128x128xf32, #tpu.memory_space<vmem>>, vector<128x128xf32>
    %c0_22 = arith.constant 0 : index
    %c0_23 = arith.constant 0 : index
    %16 = vector.load %arg13[%c0_22, %c0_23] : memref<1x128xf32, #tpu.memory_space<vmem>>, vector<1x128xf32>
    %c0_i32 = arith.constant 0 : i32
    %c3_i32 = arith.constant 3 : i32
    %17 = arith.addi %c0_i32, %c3_i32 : i32
    %c1_i32 = arith.constant 1 : i32
    %18 = scf.for %arg18 = %c0_i32 to %17 step %c1_i32 iter_args(%arg19 = %7) -> (vector<32x64xf32>)  : i32 {
      %34 = arith.truncf %arg19 : vector<32x64xf32> to vector<32x64xbf16>
      %cst_43 = arith.constant dense<0.000000e+00> : vector<64x64xf32>
      %35 = tpu.matmul %8, %34, %cst_43 {dimension_numbers = #tpu.dot_dimension_numbers<[1], [0], [0], [1], [0, 0, 1, 1], [], []>} : vector<64x32xbf16>, vector<32x64xbf16>, vector<64x64xf32> -> vector<64x64xf32>
      %36 = arith.truncf %35 : vector<64x64xf32> to vector<64x64xbf16>
      %cst_44 = arith.constant dense<0.000000e+00> : vector<64x576xf32>
      %37 = tpu.matmul %36, %11, %cst_44 {dimension_numbers = #tpu.dot_dimension_numbers<[1], [0], [0], [1], [0, 0, 1, 1], [], []>} : vector<64x64xbf16>, vector<64x576xbf16>, vector<64x576xf32> -> vector<64x576xf32>
      %38 = vector.extract_strided_slice %37 {offsets = [0, 0], sizes = [64, 64], strides = [1, 1]} : vector<64x576xf32> to vector<64x64xf32>
      %39 = vector.extract_strided_slice %10 {offsets = [0, 0], sizes = [64, 1], strides = [1, 1]} : vector<64x8xf32> to vector<64x1xf32>
      %40 = vector.extract_strided_slice %37 {offsets = [0, 64], sizes = [64, 64], strides = [1, 1]} : vector<64x576xf32> to vector<64x64xf32>
      %41 = vector.broadcast %39 : vector<64x1xf32> to vector<64x64xf32>
      %42 = arith.mulf %41, %40 : vector<64x64xf32>
      %43 = arith.addf %38, %42 : vector<64x64xf32>
      %44 = vector.extract_strided_slice %10 {offsets = [0, 1], sizes = [64, 1], strides = [1, 1]} : vector<64x8xf32> to vector<64x1xf32>
      %45 = vector.extract_strided_slice %37 {offsets = [0, 128], sizes = [64, 64], strides = [1, 1]} : vector<64x576xf32> to vector<64x64xf32>
      %46 = vector.broadcast %44 : vector<64x1xf32> to vector<64x64xf32>
      %47 = arith.mulf %46, %45 : vector<64x64xf32>
      %48 = arith.addf %43, %47 : vector<64x64xf32>
      %49 = vector.extract_strided_slice %10 {offsets = [0, 2], sizes = [64, 1], strides = [1, 1]} : vector<64x8xf32> to vector<64x1xf32>
      %50 = vector.extract_strided_slice %37 {offsets = [0, 192], sizes = [64, 64], strides = [1, 1]} : vector<64x576xf32> to vector<64x64xf32>
      %51 = vector.broadcast %49 : vector<64x1xf32> to vector<64x64xf32>
      %52 = arith.mulf %51, %50 : vector<64x64xf32>
      %53 = arith.addf %48, %52 : vector<64x64xf32>
      %54 = vector.extract_strided_slice %10 {offsets = [0, 3], sizes = [64, 1], strides = [1, 1]} : vector<64x8xf32> to vector<64x1xf32>
      %55 = vector.extract_strided_slice %37 {offsets = [0, 256], sizes = [64, 64], strides = [1, 1]} : vector<64x576xf32> to vector<64x64xf32>
      %56 = vector.broadcast %54 : vector<64x1xf32> to vector<64x64xf32>
      %57 = arith.mulf %56, %55 : vector<64x64xf32>
      %58 = arith.addf %53, %57 : vector<64x64xf32>
      %59 = vector.extract_strided_slice %10 {offsets = [0, 4], sizes = [64, 1], strides = [1, 1]} : vector<64x8xf32> to vector<64x1xf32>
      %60 = vector.extract_strided_slice %37 {offsets = [0, 320], sizes = [64, 64], strides = [1, 1]} : vector<64x576xf32> to vector<64x64xf32>
      %61 = vector.broadcast %59 : vector<64x1xf32> to vector<64x64xf32>
      %62 = arith.mulf %61, %60 : vector<64x64xf32>
      %63 = arith.addf %58, %62 : vector<64x64xf32>
      %64 = vector.extract_strided_slice %10 {offsets = [0, 5], sizes = [64, 1], strides = [1, 1]} : vector<64x8xf32> to vector<64x1xf32>
      %65 = vector.extract_strided_slice %37 {offsets = [0, 384], sizes = [64, 64], strides = [1, 1]} : vector<64x576xf32> to vector<64x64xf32>
      %66 = vector.broadcast %64 : vector<64x1xf32> to vector<64x64xf32>
      %67 = arith.mulf %66, %65 : vector<64x64xf32>
      %68 = arith.addf %63, %67 : vector<64x64xf32>
      %69 = vector.extract_strided_slice %10 {offsets = [0, 6], sizes = [64, 1], strides = [1, 1]} : vector<64x8xf32> to vector<64x1xf32>
      %70 = vector.extract_strided_slice %37 {offsets = [0, 448], sizes = [64, 64], strides = [1, 1]} : vector<64x576xf32> to vector<64x64xf32>
      %71 = vector.broadcast %69 : vector<64x1xf32> to vector<64x64xf32>
      %72 = arith.mulf %71, %70 : vector<64x64xf32>
      %73 = arith.addf %68, %72 : vector<64x64xf32>
      %74 = vector.extract_strided_slice %10 {offsets = [0, 7], sizes = [64, 1], strides = [1, 1]} : vector<64x8xf32> to vector<64x1xf32>
      %75 = vector.extract_strided_slice %37 {offsets = [0, 512], sizes = [64, 64], strides = [1, 1]} : vector<64x576xf32> to vector<64x64xf32>
      %76 = vector.broadcast %74 : vector<64x1xf32> to vector<64x64xf32>
      %77 = arith.mulf %76, %75 : vector<64x64xf32>
      %78 = arith.addf %73, %77 : vector<64x64xf32>
      %79 = arith.truncf %78 : vector<64x64xf32> to vector<64x64xbf16>
      %cst_45 = arith.constant dense<0.000000e+00> : vector<32x64xf32>
      %80 = tpu.matmul %9, %79, %cst_45 {dimension_numbers = #tpu.dot_dimension_numbers<[1], [0], [0], [1], [0, 0, 1, 1], [], []>} : vector<32x64xbf16>, vector<64x64xbf16>, vector<32x64xf32> -> vector<32x64xf32>
      %81 = vector.broadcast %12 : vector<1x64xf32> to vector<32x64xf32>
      %82 = arith.addf %80, %81 : vector<32x64xf32>
      %cst_46 = arith.constant 0.000000e+00 : f32
      %83 = vector.broadcast %cst_46 : f32 to vector<32x64xf32>
      %84 = arith.maximumf %82, %83 : vector<32x64xf32>
      %85 = tpu.concatenate %84, %arg19 in 1 : vector<32x64xf32>, vector<32x64xf32> -> vector<32x128xf32>
      %cst_47 = arith.constant dense<0.000000e+00> : vector<32x128xf32>
      %86 = tpu.matmul %85, %13, %cst_47 {dimension_numbers = #tpu.dot_dimension_numbers<[1], [0], [0], [1], [0, 0, 1, 1], [], []>} : vector<32x128xf32>, vector<128x128xf32>, vector<32x128xf32> -> vector<32x128xf32>
      %87 = vector.broadcast %14 : vector<1x128xf32> to vector<32x128xf32>
      %88 = arith.addf %86, %87 : vector<32x128xf32>
      %89 = vector.extract_strided_slice %88 {offsets = [0, 0], sizes = [32, 64], strides = [1, 1]} : vector<32x128xf32> to vector<32x64xf32>
      %90 = arith.negf %89 : vector<32x64xf32>
      %91 = math.exp %90 : vector<32x64xf32>
      %cst_48 = arith.constant 1.000000e+00 : f32
      %92 = vector.broadcast %cst_48 : f32 to vector<32x64xf32>
      %93 = arith.addf %92, %91 : vector<32x64xf32>
      %94 = arith.divf %92, %93 : vector<32x64xf32>
      %95 = vector.extract_strided_slice %88 {offsets = [0, 64], sizes = [32, 64], strides = [1, 1]} : vector<32x128xf32> to vector<32x64xf32>
      %96 = arith.negf %95 : vector<32x64xf32>
      %97 = math.exp %96 : vector<32x64xf32>
      %cst_49 = arith.constant 1.000000e+00 : f32
      %98 = vector.broadcast %cst_49 : f32 to vector<32x64xf32>
      %99 = arith.addf %98, %97 : vector<32x64xf32>
      %100 = arith.divf %98, %99 : vector<32x64xf32>
      %cst_50 = arith.constant dense<0.000000e+00> : vector<32x128xf32>
      %101 = tpu.matmul %85, %15, %cst_50 {dimension_numbers = #tpu.dot_dimension_numbers<[1], [0], [0], [1], [0, 0, 1, 1], [], []>} : vector<32x128xf32>, vector<128x128xf32>, vector<32x128xf32> -> vector<32x128xf32>
      %102 = vector.broadcast %16 : vector<1x128xf32> to vector<32x128xf32>
      %103 = arith.addf %101, %102 : vector<32x128xf32>
      %104 = vector.extract_strided_slice %103 {offsets = [0, 0], sizes = [32, 64], strides = [1, 1]} : vector<32x128xf32> to vector<32x64xf32>
      %105 = vector.extract_strided_slice %103 {offsets = [0, 64], sizes = [32, 64], strides = [1, 1]} : vector<32x128xf32> to vector<32x64xf32>
      %106 = arith.mulf %94, %105 : vector<32x64xf32>
      %107 = arith.addf %104, %106 : vector<32x64xf32>
      %108 = math.tanh %107 : vector<32x64xf32>
      %cst_51 = arith.constant 1.000000e+00 : f32
      %109 = vector.broadcast %cst_51 : f32 to vector<32x64xf32>
      %110 = arith.subf %109, %100 : vector<32x64xf32>
      %111 = arith.mulf %110, %108 : vector<32x64xf32>
      %112 = arith.mulf %100, %arg19 : vector<32x64xf32>
      %113 = arith.addf %111, %112 : vector<32x64xf32>
      scf.yield %113 : vector<32x64xf32>
    }
    %19 = tpu.concatenate %7, %18 in 1 : vector<32x64xf32>, vector<32x64xf32> -> vector<32x128xf32>
    %c0_24 = arith.constant 0 : index
    %c0_25 = arith.constant 0 : index
    %20 = vector.load %arg4[%c0_24, %c0_25] : memref<8x32xbf16, #tpu.memory_space<vmem>>, vector<8x32xbf16>
    %c0_26 = arith.constant 0 : index
    %c0_27 = arith.constant 0 : index
    %21 = vector.load %arg5[%c0_26, %c0_27] : memref<32x8xbf16, #tpu.memory_space<vmem>>, vector<32x8xbf16>
    %22 = arith.extf %21 : vector<32x8xbf16> to vector<32x8xf32>
    %cst_28 = arith.constant 0.000000e+00 : f32
    %23 = vector.broadcast %cst_28 : f32 to vector<32x8xf32>
    %24 = arith.cmpf ogt, %22, %23 : vector<32x8xf32>
    %c0_29 = arith.constant 0 : index
    %c0_30 = arith.constant 0 : index
    %25 = vector.load %arg14[%c0_29, %c0_30] : memref<256x512xf32, #tpu.memory_space<vmem>>, vector<256x512xf32>
    %c0_31 = arith.constant 0 : index
    %c0_32 = arith.constant 0 : index
    %26 = vector.load %arg15[%c0_31, %c0_32] : memref<128x512xf32, #tpu.memory_space<vmem>>, vector<128x512xf32>
    %c0_33 = arith.constant 0 : index
    %c0_34 = arith.constant 0 : index
    %27 = vector.load %arg16[%c0_33, %c0_34] : memref<1x512xf32, #tpu.memory_space<vmem>>, vector<1x512xf32>
    %cst_35 = arith.constant 0.000000e+00 : f32
    %28 = vector.broadcast %cst_35 : f32 to vector<8x256xf32>
    %cst_36 = arith.constant 0.000000e+00 : f32
    %29 = vector.broadcast %cst_36 : f32 to vector<8x128xf32>
    %cst_37 = arith.constant 0.000000e+00 : f32
    %30 = vector.broadcast %cst_37 : f32 to vector<8x128xf32>
    %c0_i32_38 = arith.constant 0 : i32
    %c3_i32_39 = arith.constant 3 : i32
    %31 = arith.addi %c0_i32_38, %c3_i32_39 : i32
    %c1_i32_40 = arith.constant 1 : i32
    %32:3 = scf.for %arg18 = %c0_i32_38 to %31 step %c1_i32_40 iter_args(%arg19 = %28, %arg20 = %29, %arg21 = %30) -> (vector<8x256xf32>, vector<8x128xf32>, vector<8x128xf32>)  : i32 {
      %cst_43 = arith.constant dense<0.000000e+00> : vector<8x512xf32>
      %34 = tpu.matmul %arg19, %25, %cst_43 {dimension_numbers = #tpu.dot_dimension_numbers<[1], [0], [0], [1], [0, 0, 1, 1], [], []>} : vector<8x256xf32>, vector<256x512xf32>, vector<8x512xf32> -> vector<8x512xf32>
      %cst_44 = arith.constant dense<0.000000e+00> : vector<8x512xf32>
      %35 = tpu.matmul %arg20, %26, %cst_44 {dimension_numbers = #tpu.dot_dimension_numbers<[1], [0], [0], [1], [0, 0, 1, 1], [], []>} : vector<8x128xf32>, vector<128x512xf32>, vector<8x512xf32> -> vector<8x512xf32>
      %36 = arith.addf %34, %35 : vector<8x512xf32>
      %37 = vector.broadcast %27 : vector<1x512xf32> to vector<8x512xf32>
      %38 = arith.addf %36, %37 : vector<8x512xf32>
      %39 = vector.extract_strided_slice %38 {offsets = [0, 0], sizes = [8, 128], strides = [1, 1]} : vector<8x512xf32> to vector<8x128xf32>
      %40 = arith.negf %39 : vector<8x128xf32>
      %41 = math.exp %40 : vector<8x128xf32>
      %cst_45 = arith.constant 1.000000e+00 : f32
      %42 = vector.broadcast %cst_45 : f32 to vector<8x128xf32>
      %43 = arith.addf %42, %41 : vector<8x128xf32>
      %44 = arith.divf %42, %43 : vector<8x128xf32>
      %45 = vector.extract_strided_slice %38 {offsets = [0, 128], sizes = [8, 128], strides = [1, 1]} : vector<8x512xf32> to vector<8x128xf32>
      %46 = arith.negf %45 : vector<8x128xf32>
      %47 = math.exp %46 : vector<8x128xf32>
      %cst_46 = arith.constant 1.000000e+00 : f32
      %48 = vector.broadcast %cst_46 : f32 to vector<8x128xf32>
      %49 = arith.addf %48, %47 : vector<8x128xf32>
      %50 = arith.divf %48, %49 : vector<8x128xf32>
      %51 = vector.extract_strided_slice %38 {offsets = [0, 256], sizes = [8, 128], strides = [1, 1]} : vector<8x512xf32> to vector<8x128xf32>
      %52 = math.tanh %51 : vector<8x128xf32>
      %53 = vector.extract_strided_slice %38 {offsets = [0, 384], sizes = [8, 128], strides = [1, 1]} : vector<8x512xf32> to vector<8x128xf32>
      %54 = arith.negf %53 : vector<8x128xf32>
      %55 = math.exp %54 : vector<8x128xf32>
      %cst_47 = arith.constant 1.000000e+00 : f32
      %56 = vector.broadcast %cst_47 : f32 to vector<8x128xf32>
      %57 = arith.addf %56, %55 : vector<8x128xf32>
      %58 = arith.divf %56, %57 : vector<8x128xf32>
      %59 = arith.mulf %50, %arg21 : vector<8x128xf32>
      %60 = arith.mulf %44, %52 : vector<8x128xf32>
      %61 = arith.addf %59, %60 : vector<8x128xf32>
      %62 = math.tanh %61 : vector<8x128xf32>
      %63 = arith.mulf %58, %62 : vector<8x128xf32>
      %64 = arith.truncf %63 : vector<8x128xf32> to vector<8x128xbf16>
      %cst_48 = arith.constant dense<0.000000e+00> : vector<32x128xf32>
      %65 = tpu.matmul %21, %64, %cst_48 {dimension_numbers = #tpu.dot_dimension_numbers<[1], [0], [0], [1], [0, 0, 1, 1], [], []>} : vector<32x8xbf16>, vector<8x128xbf16>, vector<32x128xf32> -> vector<32x128xf32>
      %66 = arith.mulf %19, %65 : vector<32x128xf32>
      %cst_49 = arith.constant dense<0.000000e+00> : vector<32xf32>
      %67 = vector.multi_reduction <add>, %66, %cst_49 [1] : vector<32x128xf32> to vector<32xf32>
      %68 = vector.shape_cast %67 : vector<32xf32> to vector<32x1xf32>
      %cst_50 = arith.constant -1.000000e+30 : f32
      %69 = vector.shape_cast %68 : vector<32x1xf32> to vector<32x1xf32>
      %70 = vector.broadcast %69 : vector<32x1xf32> to vector<32x8xf32>
      %71 = vector.broadcast %cst_50 : f32 to vector<32x8xf32>
      %72 = arith.select %24, %70, %71 : vector<32x8xi1>, vector<32x8xf32>
      %cst_51 = arith.constant dense<0xFF800000> : vector<8xf32>
      %73 = vector.multi_reduction <maximumf>, %72, %cst_51 [0] : vector<32x8xf32> to vector<8xf32>
      %74 = vector.shape_cast %73 : vector<8xf32> to vector<1x8xf32>
      %75 = vector.broadcast %74 : vector<1x8xf32> to vector<32x8xf32>
      %76 = arith.mulf %22, %75 : vector<32x8xf32>
      %cst_52 = arith.constant dense<0.000000e+00> : vector<32xf32>
      %77 = vector.multi_reduction <add>, %76, %cst_52 [1] : vector<32x8xf32> to vector<32xf32>
      %78 = vector.shape_cast %77 : vector<32xf32> to vector<32x1xf32>
      %79 = arith.subf %68, %78 : vector<32x1xf32>
      %80 = math.exp %79 : vector<32x1xf32>
      %81 = vector.broadcast %80 : vector<32x1xf32> to vector<32x8xf32>
      %82 = arith.mulf %22, %81 : vector<32x8xf32>
      %cst_53 = arith.constant dense<0.000000e+00> : vector<8xf32>
      %83 = vector.multi_reduction <add>, %82, %cst_53 [0] : vector<32x8xf32> to vector<8xf32>
      %84 = vector.shape_cast %83 : vector<8xf32> to vector<1x8xf32>
      %85 = vector.broadcast %84 : vector<1x8xf32> to vector<32x8xf32>
      %86 = arith.mulf %22, %85 : vector<32x8xf32>
      %cst_54 = arith.constant dense<0.000000e+00> : vector<32xf32>
      %87 = vector.multi_reduction <add>, %86, %cst_54 [1] : vector<32x8xf32> to vector<32xf32>
      %88 = vector.shape_cast %87 : vector<32xf32> to vector<32x1xf32>
      %89 = tpu.reciprocal %88 {approx = true} : vector<32x1xf32> -> vector<32x1xf32>
      %90 = arith.mulf %80, %89 : vector<32x1xf32>
      %91 = vector.broadcast %90 : vector<32x1xf32> to vector<32x128xf32>
      %92 = arith.mulf %19, %91 : vector<32x128xf32>
      %93 = arith.truncf %92 : vector<32x128xf32> to vector<32x128xbf16>
      %cst_55 = arith.constant dense<0.000000e+00> : vector<8x128xf32>
      %94 = tpu.matmul %20, %93, %cst_55 {dimension_numbers = #tpu.dot_dimension_numbers<[1], [0], [0], [1], [0, 0, 1, 1], [], []>} : vector<8x32xbf16>, vector<32x128xbf16>, vector<8x128xf32> -> vector<8x128xf32>
      %95 = tpu.concatenate %63, %94 in 1 : vector<8x128xf32>, vector<8x128xf32> -> vector<8x256xf32>
      scf.yield %95, %63, %61 : vector<8x256xf32>, vector<8x128xf32>, vector<8x128xf32>
    }
    %c0_41 = arith.constant 0 : index
    %c0_42 = arith.constant 0 : index
    %33 = vector.load %arg17[%c0_41, %c0_42] : memref<8x256xf32, #tpu.memory_space<vmem>>, vector<8x256xf32>
    tpu.vector_store %arg17[%c0_41, %c0_42], %32#0 {strides = array<i32>} : memref<8x256xf32, #tpu.memory_space<vmem>>, vector<8x256xf32>,
    return
  }
}

</mosaic_0001>

<llo_original>
// kernel: tpu_custom_call.1
$region0: #{tpu_custom_call.1}
  #allocation0 [shape = 'u32[]', space=smem, size = 0x4, offset = 0x4, fixed_abs, tag = 'smem constant byte address 0x4 - core index']
  #allocation1 [shape = 'u32[144,128]{1,0:T(1,128)}', space=vmem, size = 0x12000, scoped, tag = 'internal scratch']
  %s0 = inlined_call_operand.vmem [shape: f32[32,16], index: 0, kind: input, shape index: {}]
  %s1 = inlined_call_operand.vmem [shape: f32[64,8], index: 1, kind: input, shape index: {}]
  %s2 = inlined_call_operand.vmem [shape: bf16[64,32], index: 2, kind: input, shape index: {}]
  %s3 = inlined_call_operand.vmem [shape: bf16[32,64], index: 3, kind: input, shape index: {}]
  %s4 = inlined_call_operand.vmem [shape: bf16[8,32], index: 4, kind: input, shape index: {}]
  %s5 = inlined_call_operand.vmem [shape: bf16[32,8], index: 5, kind: input, shape index: {}]
  %s6 = inlined_call_operand.vmem [shape: f32[16,64], index: 6, kind: input, shape index: {}]
  %s7 = inlined_call_operand.vmem [shape: f32[1,64], index: 7, kind: input, shape index: {}]
  %s8 = inlined_call_operand.vmem [shape: bf16[64,576], index: 8, kind: input, shape index: {}]
  %s9 = inlined_call_operand.vmem [shape: f32[1,64], index: 9, kind: input, shape index: {}]
  %s10 = inlined_call_operand.hbm [shape: f32[128,128], index: 10, kind: input, shape index: {}]
  %s11 = inlined_call_operand.vmem [shape: f32[1,128], index: 11, kind: input, shape index: {}]
  %s12 = inlined_call_operand.hbm [shape: f32[128,128], index: 12, kind: input, shape index: {}]
  %s13 = inlined_call_operand.vmem [shape: f32[1,128], index: 13, kind: input, shape index: {}]
  %s14 = inlined_call_operand.hbm [shape: f32[256,512], index: 14, kind: input, shape index: {}]
  %s15 = inlined_call_operand.hbm [shape: f32[128,512], index: 15, kind: input, shape index: {}]
  %s16 = inlined_call_operand.vmem [shape: f32[1,512], index: 16, kind: input, shape index: {}]
  %s17 = inlined_call_operand.hbm [shape: f32[8,256], index: 17, kind: output, shape index: {}]
  %s18 = sld [smem:[#allocation0]]
  $region108: #{tpu_custom_call.1} parent=0
    _
  %s20 = ssub.s32 1, %s18
  %s21 = scalar_select 0, %s20, %s18
  $region1: #{tpu_custom_call.1} parent=0
    #allocation2 [shape = 'u8[65536]{0}', space=vmem, size = 0x10000, scoped, tag = 'input window, operand 10, single buffered']
    #allocation3 [shape = 's32[1]{0}', space=sflag, size = 0x4, scoped, tag = 'scoped memory for tpu_custom_call.1']
    #allocation4 [shape = 's32[1]{0}', space=sflag, size = 0x4, scoped, tag = 'scoped memory for tpu_custom_call.1']
    #allocation5 [shape = 'u8[65536]{0}', space=vmem, size = 0x10000, scoped, tag = 'input window, operand 12, single buffered']
    #allocation6 [shape = 's32[1]{0}', space=sflag, size = 0x4, scoped, tag = 'scoped memory for tpu_custom_call.1']
    #allocation7 [shape = 'u8[524288]{0}', space=vmem, size = 0x80000, scoped, tag = 'input window, operand 14, single buffered']
    #allocation8 [shape = 'u8[262144]{0}', space=vmem, size = 0x40000, scoped, tag = 'input window, operand 15, single buffered']
    #allocation9 [shape = 's32[1]{0}', space=sflag, size = 0x4, scoped, tag = 'scoped memory for tpu_custom_call.1']
    #allocation10 [shape = 'u8[8192]{0}', space=vmem, size = 0x2000, scoped, tag = 'output window, operand 0, single buffered']
    %22 = vsyncpa [#allocation3], 0
    %23 = vsyncpa [#allocation6], 0
    %24 = vsyncpa [#allocation9], 0
    %25 = vsyncpa [#allocation4], 0
    // Predicated region
    $region2: #{tpu_custom_call.1} parent=1 // pred_check
      _
    $region3: #{tpu_custom_call.1} parent=1 // pred_check_branch
      %27 = sbr.rel (0) target = $region5
    $region4: #{tpu_custom_call.1} parent=1 // pred_region
      _
    $region5: #{tpu_custom_call.1} parent=1 // pred_fallthru
      _
    // Predicated region
    $region6: #{tpu_custom_call.1} parent=1 // pred_check
      _
    $region7: #{tpu_custom_call.1} parent=1 // pred_check_branch
      %29 = sbr.rel (0) target = $region9
    $region8: #{tpu_custom_call.1} parent=1 // pred_region
      _
    $region9: #{tpu_custom_call.1} parent=1 // pred_fallthru
      _
    // Predicated region
    $region10: #{tpu_custom_call.1} parent=1 // pred_check
      _
    $region11: #{tpu_custom_call.1} parent=1 // pred_check_branch
      %31 = sbr.rel (0) target = $region13
    $region12: #{tpu_custom_call.1} parent=1 // pred_region
      _
    $region13: #{tpu_custom_call.1} parent=1 // pred_fallthru
      _
    // Predicated region
    $region14: #{tpu_custom_call.1} parent=1 // pred_check
      _
    $region15: #{tpu_custom_call.1} parent=1 // pred_check_branch
      %33 = sbr.rel (0) target = $region17
    $region16: #{tpu_custom_call.1} parent=1 // pred_region
      _
    $region17: #{tpu_custom_call.1} parent=1 // pred_fallthru
      _
    // Predicated region
    $region18: #{tpu_custom_call.1} parent=1 // pred_check
      _
    $region19: #{tpu_custom_call.1} parent=1 // pred_check_branch
      %35 = sbr.rel (0) target = $region21
    $region20: #{tpu_custom_call.1} parent=1 // pred_region
      _
    $region21: #{tpu_custom_call.1} parent=1 // pred_fallthru
      _
    // Predicated region
    $region22: #{tpu_custom_call.1} parent=1 // pred_check
      _
    $region23: #{tpu_custom_call.1} parent=1 // pred_check_branch
      %37 = sbr.rel (0) target = $region25
    $region24: #{tpu_custom_call.1} parent=1 // pred_region
      _
    $region25: #{tpu_custom_call.1} parent=1 // pred_fallthru
      _
    // Predicated region
    $region26: #{tpu_custom_call.1} parent=1 // pred_check
      _
    $region27: #{tpu_custom_call.1} parent=1 // pred_check_branch
      %39 = sbr.rel (0) target = $region29
    $region28: #{tpu_custom_call.1} parent=1 // pred_region
      _
    $region29: #{tpu_custom_call.1} parent=1 // pred_fallthru
      _
    // Predicated region
    $region30: #{tpu_custom_call.1} parent=1 // pred_check
      _
    $region31: #{tpu_custom_call.1} parent=1 // pred_check_branch
      %41 = sbr.rel (0) target = $region33
    $region32: #{tpu_custom_call.1} parent=1 // pred_region
      _
    $region33: #{tpu_custom_call.1} parent=1 // pred_fallthru
      _
    // Predicated region
    $region34: #{tpu_custom_call.1} parent=1 // pred_check
      _
    $region35: #{tpu_custom_call.1} parent=1 // pred_check_branch
      %43 = sbr.rel (0) target = $region37
    $region36: #{tpu_custom_call.1} parent=1 // pred_region
      _
    $region37: #{tpu_custom_call.1} parent=1 // pred_fallthru
      _
    // Predicated region
    $region38: #{tpu_custom_call.1} parent=1 // pred_check
      _
    $region39: #{tpu_custom_call.1} parent=1 // pred_check_branch
      %45 = sbr.rel (0) target = $region41
    $region40: #{tpu_custom_call.1} parent=1 // pred_region
      _
    $region41: #{tpu_custom_call.1} parent=1 // pred_fallthru
      _
    // Predicated region
    $region42: #{tpu_custom_call.1} parent=1 // pred_check
      _
    $region43: #{tpu_custom_call.1} parent=1 // pred_check_branch
      %47 = sbr.rel (0) target = $region45
    $region44: #{tpu_custom_call.1} parent=1 // pred_region
      %s49 = ssub.s32 2048, 2048
      %50 = vsyncadd [#allocation3], %s49
      %s51 = sshll.u32 [#allocation2], 4
      %s52 = int_to_ptr.vmem [resolvable:$true] %s51
      %57 = dma.hbm_to_vmem [thread:$0]  %s10, 2048, %s52, [#allocation3], 128, 128, 8
    $region45: #{tpu_custom_call.1} parent=1 // pred_fallthru
      _
    // Predicated region
    $region46: #{tpu_custom_call.1} parent=1 // pred_check
      _
    $region47: #{tpu_custom_call.1} parent=1 // pred_check_branch
      %59 = sbr.rel (0) target = $region49
    $region48: #{tpu_custom_call.1} parent=1 // pred_region
      _
    $region49: #{tpu_custom_call.1} parent=1 // pred_fallthru
      _
    // Predicated region
    $region50: #{tpu_custom_call.1} parent=1 // pred_check
      _
    $region51: #{tpu_custom_call.1} parent=1 // pred_check_branch
      %61 = sbr.rel (0) target = $region53
    $region52: #{tpu_custom_call.1} parent=1 // pred_region
      %s63 = ssub.s32 2048, 2048
      %64 = vsyncadd [#allocation6], %s63
      %s65 = sshll.u32 [#allocation5], 4
      %s66 = int_to_ptr.vmem [resolvable:$true] %s65
      %71 = dma.hbm_to_vmem [thread:$0]  %s12, 2048, %s66, [#allocation6], 128, 128, 8
    $region53: #{tpu_custom_call.1} parent=1 // pred_fallthru
      _
    // Predicated region
    $region54: #{tpu_custom_call.1} parent=1 // pred_check
      _
    $region55: #{tpu_custom_call.1} parent=1 // pred_check_branch
      %73 = sbr.rel (0) target = $region57
    $region56: #{tpu_custom_call.1} parent=1 // pred_region
      _
    $region57: #{tpu_custom_call.1} parent=1 // pred_fallthru
      _
    // Predicated region
    $region58: #{tpu_custom_call.1} parent=1 // pred_check
      _
    $region59: #{tpu_custom_call.1} parent=1 // pred_check_branch
      %75 = sbr.rel (0) target = $region61
    $region60: #{tpu_custom_call.1} parent=1 // pred_region
      %s77 = ssub.s32 16384, 16384
      %78 = vsyncadd [#allocation6], %s77
      %s79 = sshll.u32 [#allocation7], 4
      %s80 = int_to_ptr.vmem [resolvable:$true] %s79
      %85 = dma.hbm_to_vmem [thread:$0]  %s14, 16384, %s80, [#allocation6], 512, 512, 32
    $region61: #{tpu_custom_call.1} parent=1 // pred_fallthru
      _
    // Predicated region
    $region62: #{tpu_custom_call.1} parent=1 // pred_check
      _
    $region63: #{tpu_custom_call.1} parent=1 // pred_check_branch
      %87 = sbr.rel (0) target = $region65
    $region64: #{tpu_custom_call.1} parent=1 // pred_region
      %s89 = ssub.s32 8192, 8192
      %90 = vsyncadd [#allocation9], %s89
      %s91 = sshll.u32 [#allocation8], 4
      %s92 = int_to_ptr.vmem [resolvable:$true] %s91
      %97 = dma.hbm_to_vmem [thread:$0]  %s15, 8192, %s92, [#allocation9], 512, 512, 32
    $region65: #{tpu_custom_call.1} parent=1 // pred_fallthru
      _
    // Predicated region
    $region66: #{tpu_custom_call.1} parent=1 // pred_check
      _
    $region67: #{tpu_custom_call.1} parent=1 // pred_check_branch
      %99 = sbr.rel (0) target = $region69
    $region68: #{tpu_custom_call.1} parent=1 // pred_region
      _
    $region69: #{tpu_custom_call.1} parent=1 // pred_fallthru
      _
    // Predicated region
    $region70: #{tpu_custom_call.1} parent=1 // pred_check
      _
    $region71: #{tpu_custom_call.1} parent=1 // pred_check_branch
      %101 = sbr.rel (0) target = $region73
    $region72: #{tpu_custom_call.1} parent=1 // pred_region
      %102 = dma.done [#allocation3], 2048
    $region73: #{tpu_custom_call.1} parent=1 // pred_fallthru
      _
    // Predicated region
    $region74: #{tpu_custom_call.1} parent=1 // pred_check
      _
    $region75: #{tpu_custom_call.1} parent=1 // pred_check_branch
      %104 = sbr.rel (0) target = $region77
    $region76: #{tpu_custom_call.1} parent=1 // pred_region
      %105 = dma.done [#allocation6], 2048
    $region77: #{tpu_custom_call.1} parent=1 // pred_fallthru
      _
    // Predicated region
    $region78: #{tpu_custom_call.1} parent=1 // pred_check
      _
    $region79: #{tpu_custom_call.1} parent=1 // pred_check_branch
      %107 = sbr.rel (0) target = $region81
    $region80: #{tpu_custom_call.1} parent=1 // pred_region
      %108 = dma.done [#allocation6], 16384
    $region81: #{tpu_custom_call.1} parent=1 // pred_fallthru
      _
    // Predicated region
    $region82: #{tpu_custom_call.1} parent=1 // pred_check
      _
    $region83: #{tpu_custom_call.1} parent=1 // pred_check_branch
      %110 = sbr.rel (0) target = $region85
    $region84: #{tpu_custom_call.1} parent=1 // pred_region
      %111 = dma.done [#allocation9], 8192
    $region85: #{tpu_custom_call.1} parent=1 // pred_fallthru
      _
    %v113 = vld [vmem:[%s0] sm:$0xff]
    %v114 = vld [vmem:[%s0 + $0x8] sm:$0xff]
    %v115 = vld [vmem:[%s0 + $0x10] sm:$0xff]
    %v116 = vld [vmem:[%s0 + $0x18] sm:$0xff]
    %v117 = vld [vmem:[%s6] sm:$0xff]
    %v118 = vld [vmem:[%s6 + $0x8] sm:$0xff]
    %v119 = vld [vmem:[%s7] sm:$0x1]
    %v121 = vlaneseq
    %v122 = vshrl.u32 %v121, 7
    %v123 = vsub.s32 0, %v122
    %v124 = vrot.slane %v119, %v123
    %vm126 = vcmask 130048
    %v128 = vsel %vm126, %v113, 0
    %v131 = vsel %vm126, %v114, 0
    %v134 = vsel %vm126, %v115, 0
    %v137 = vsel %vm126, %v116, 0
    %139 = vmatprep.subr.mxu0 0.0
    %140 = vmatpush1.msra.mxu0 0.0
    %141 = vmatprep.subr.mxu0 0.0
    %142 = vmatpush1.msra.mxu0 0.0
    %143 = vmatprep.subr.mxu0 0.0
    %144 = vmatpush1.msra.mxu0 0.0
    %145 = vmatprep.subr.mxu0 0.0
    %146 = vmatpush1.msra.mxu0 0.0
    %147 = vmatprep.subr.mxu0 0.0
    %148 = vmatpush1.msra.mxu0 0.0
    %149 = vmatprep.subr.mxu0 0.0
    %150 = vmatpush1.msra.mxu0 0.0
    %151 = vmatprep.subr.mxu0 0.0
    %152 = vmatpush1.msra.mxu0 0.0
    %153 = vmatprep.subr.mxu0 0.0
    %154 = vmatpush1.msra.mxu0 0.0
    %155 = vmatprep.subr.mxu0 0.0
    %156 = vmatpush1.msra.mxu0 0.0
    %157 = vmatprep.subr.mxu0 0.0
    %158 = vmatpush1.msra.mxu0 0.0
    %159 = vmatprep.subr.mxu0 0.0
    %160 = vmatpush1.msra.mxu0 0.0
    %161 = vmatprep.subr.mxu0 0.0
    %162 = vmatpush1.msra.mxu0 0.0
    %163 = vmatprep.subr.mxu0 0.0
    %164 = vmatpush1.msra.mxu0 0.0
    %165 = vmatprep.subr.mxu0 0.0
    %166 = vmatpush1.msra.mxu0 0.0
    %167 = vmatprep.subr.mxu0 0.0
    %168 = vmatpush1.msra.mxu0 %v118
    %169 = vmatprep.subr.mxu0 0.0
    %170 = vmatpush1.msra.mxu0 %v117
    %171 = vmatprep.subr.mxu0 0.0
    %172 = vmatpush2.msra.mxu0 0.0
    %173 = vmatprep.subr.mxu0 0.0
    %174 = vmatpush2.msra.mxu0 0.0
    %175 = vmatprep.subr.mxu0 0.0
    %176 = vmatpush2.msra.mxu0 0.0
    %177 = vmatprep.subr.mxu0 0.0
    %178 = vmatpush2.msra.mxu0 0.0
    %179 = vmatprep.subr.mxu0 0.0
    %180 = vmatpush2.msra.mxu0 0.0
    %181 = vmatprep.subr.mxu0 0.0
    %182 = vmatpush2.msra.mxu0 0.0
    %183 = vmatprep.subr.mxu0 0.0
    %184 = vmatpush2.msra.mxu0 0.0
    %185 = vmatprep.subr.mxu0 0.0
    %186 = vmatpush2.msra.mxu0 0.0
    %187 = vmatprep.subr.mxu0 0.0
    %188 = vmatpush2.msra.mxu0 0.0
    %189 = vmatprep.subr.mxu0 0.0
    %190 = vmatpush2.msra.mxu0 0.0
    %191 = vmatprep.subr.mxu0 0.0
    %192 = vmatpush2.msra.mxu0 0.0
    %193 = vmatprep.subr.mxu0 0.0
    %194 = vmatpush2.msra.mxu0 0.0
    %195 = vmatprep.subr.mxu0 0.0
    %196 = vmatpush2.msra.mxu0 0.0
    %197 = vmatprep.subr.mxu0 0.0
    %198 = vmatpush2.msra.mxu0 0.0
    %199 = vmatprep.subr.mxu0 0.0
    %200 = vmatpush2.msra.mxu0 0.0
    %201 = vmatprep.subr.mxu0 0.0
    %202 = vmatpush2.msra.mxu0 0.0
    %203 = vmatprep.mubr.f32.mxu0 0.0
    %204 = vmatmul.mubr.f32.gmra.mxu0 %v128
    %v205 = vpop.f32.mrf.mxu0
    %v206 = vadd.f32 %v124, %v205
    %v207 = vpop.f32.mrf.mxu0
    %208 = vmatprep.mubr.f32.mxu0 0.0
    %209 = vmatmul.mubr.f32.gmra.mxu0 %v131
    %v210 = vpop.f32.mrf.mxu0
    %v211 = vadd.f32 %v124, %v210
    %v212 = vpop.f32.mrf.mxu0
    %213 = vmatprep.mubr.f32.mxu0 0.0
    %214 = vmatmul.mubr.f32.gmra.mxu0 %v134
    %v215 = vpop.f32.mrf.mxu0
    %v216 = vadd.f32 %v124, %v215
    %v217 = vpop.f32.mrf.mxu0
    %218 = vmatprep.mubr.f32.mxu0 0.0
    %219 = vmatmul.mubr.f32.gmra.mxu0 %v137
    %v220 = vpop.f32.mrf.mxu0
    %v221 = vadd.f32 %v124, %v220
    %v222 = vpop.f32.mrf.mxu0
    %223 = vdwg.mxu0
    %v224 = vmax.f32 %v206, 0.0
    %v225 = vmax.f32 %v211, 0.0
    %v226 = vmax.f32 %v216, 0.0
    %v227 = vmax.f32 %v221, 0.0
    %v228 = vld [vmem:[%s2] sm:$0xf]
    %v229 = vld [vmem:[%s2 + $0x4] sm:$0xf]
    %v230 = vld [vmem:[%s2 + $0x8] sm:$0xf]
    %v231 = vld [vmem:[%s2 + $0xc] sm:$0xf]
    %v232 = vld [vmem:[%s2 + $0x10] sm:$0xf]
    %v233 = vld [vmem:[%s2 + $0x14] sm:$0xf]
    %v234 = vld [vmem:[%s2 + $0x18] sm:$0xf]
    %v235 = vld [vmem:[%s2 + $0x1c] sm:$0xf]
    %v236 = vld [vmem:[%s3] sm:$0xf]
    %v237 = vld [vmem:[%s3 + $0x4] sm:$0xf]
    %v238 = vld [vmem:[%s3 + $0x8] sm:$0xf]
    %v239 = vld [vmem:[%s3 + $0xc] sm:$0xf]
    %v240 = vld [vmem:[%s1] sm:$0xff]
    %v241 = vld [vmem:[%s1 + $0x8] sm:$0xff]
    %v242 = vld [vmem:[%s1 + $0x10] sm:$0xff]
    %v243 = vld [vmem:[%s1 + $0x18] sm:$0xff]
    %v244 = vld [vmem:[%s1 + $0x20] sm:$0xff]
    %v245 = vld [vmem:[%s1 + $0x28] sm:$0xff]
    %v246 = vld [vmem:[%s1 + $0x30] sm:$0xff]
    %v247 = vld [vmem:[%s1 + $0x38] sm:$0xff]
    %v248 = vld [vmem:[%s8] sm:$0xff]
    %v249 = vld [vmem:[%s8 + $0x8] sm:$0xff]
    %v250 = vld [vmem:[%s8 + $0x10] sm:$0xf]
    %v251 = vld [vmem:[%s8 + $0x14] sm:$0xff]
    %v252 = vld [vmem:[%s8 + $0x1c] sm:$0xff]
    %v253 = vld [vmem:[%s8 + $0x24] sm:$0xf]
    %v254 = vld [vmem:[%s8 + $0x28] sm:$0xff]
    %v255 = vld [vmem:[%s8 + $0x30] sm:$0xff]
    %v256 = vld [vmem:[%s8 + $0x38] sm:$0xf]
    %v257 = vld [vmem:[%s8 + $0x3c] sm:$0xff]
    %v258 = vld [vmem:[%s8 + $0x44] sm:$0xff]
    %v259 = vld [vmem:[%s8 + $0x4c] sm:$0xf]
    %v260 = vld [vmem:[%s8 + $0x50] sm:$0xff]
    %v261 = vld [vmem:[%s8 + $0x58] sm:$0xff]
    %v262 = vld [vmem:[%s8 + $0x60] sm:$0xf]
    %v263 = vld [vmem:[%s8 + $0x64] sm:$0xff]
    %v264 = vld [vmem:[%s8 + $0x6c] sm:$0xff]
    %v265 = vld [vmem:[%s8 + $0x74] sm:$0xf]
    %v266 = vld [vmem:[%s8 + $0x78] sm:$0xff]
    %v267 = vld [vmem:[%s8 + $0x80] sm:$0xff]
    %v268 = vld [vmem:[%s8 + $0x88] sm:$0xf]
    %v269 = vld [vmem:[%s8 + $0x8c] sm:$0xff]
    %v270 = vld [vmem:[%s8 + $0x94] sm:$0xff]
    %v271 = vld [vmem:[%s8 + $0x9c] sm:$0xf]
    %v272 = vld [vmem:[%s9] sm:$0x1]
    %v273 = vld [vmem:[#allocation2] sm:$0xff]
    %v274 = vld [vmem:[#allocation2 + $0x8] sm:$0xff]
    %v275 = vld [vmem:[#allocation2 + $0x10] sm:$0xff]
    %v276 = vld [vmem:[#allocation2 + $0x18] sm:$0xff]
    %v277 = vld [vmem:[#allocation2 + $0x20] sm:$0xff]
    %v278 = vld [vmem:[#allocation2 + $0x28] sm:$0xff]
    %v279 = vld [vmem:[#allocation2 + $0x30] sm:$0xff]
    %v280 = vld [vmem:[#allocation2 + $0x38] sm:$0xff]
    %v281 = vld [vmem:[#allocation2 + $0x40] sm:$0xff]
    %v282 = vld [vmem:[#allocation2 + $0x48] sm:$0xff]
    %v283 = vld [vmem:[#allocation2 + $0x50] sm:$0xff]
    %v284 = vld [vmem:[#allocation2 + $0x58] sm:$0xff]
    %v285 = vld [vmem:[#allocation2 + $0x60] sm:$0xff]
    %v286 = vld [vmem:[#allocation2 + $0x68] sm:$0xff]
    %v287 = vld [vmem:[#allocation2 + $0x70] sm:$0xff]
    %v288 = vld [vmem:[#allocation2 + $0x78] sm:$0xff]
    %v289 = vld [vmem:[%s11] sm:$0x1]
    %v290 = vld [vmem:[#allocation5] sm:$0xff]
    %v291 = vld [vmem:[#allocation5 + $0x8] sm:$0xff]
    %v292 = vld [vmem:[#allocation5 + $0x10] sm:$0xff]
    %v293 = vld [vmem:[#allocation5 + $0x18] sm:$0xff]
    %v294 = vld [vmem:[#allocation5 + $0x20] sm:$0xff]
    %v295 = vld [vmem:[#allocation5 + $0x28] sm:$0xff]
    %v296 = vld [vmem:[#allocation5 + $0x30] sm:$0xff]
    %v297 = vld [vmem:[#allocation5 + $0x38] sm:$0xff]
    %v298 = vld [vmem:[#allocation5 + $0x40] sm:$0xff]
    %v299 = vld [vmem:[#allocation5 + $0x48] sm:$0xff]
    %v300 = vld [vmem:[#allocation5 + $0x50] sm:$0xff]
    %v301 = vld [vmem:[#allocation5 + $0x58] sm:$0xff]
    %v302 = vld [vmem:[#allocation5 + $0x60] sm:$0xff]
    %v303 = vld [vmem:[#allocation5 + $0x68] sm:$0xff]
    %v304 = vld [vmem:[#allocation5 + $0x70] sm:$0xff]
    %v305 = vld [vmem:[#allocation5 + $0x78] sm:$0xff]
    %v306 = vld [vmem:[%s13] sm:$0x1]
    loop: start=0, step=1, limit=3
    $region86: #{tpu_custom_call.1} parent=1 // loop_pre_header
      _
    $region87: #{tpu_custom_call.1} parent=1 // loop_header
      %s308 = sphi 0, %s312
      %p309 = scmp.ge.s32.totalorder %s308, 3
      %v313 = vphi %v224, %v1639
      %v314 = vphi %v225, %v1641
      %v315 = vphi %v226, %v1643
      %v316 = vphi %v227, %v1645
    $region88: #{tpu_custom_call.1} parent=1 // loop_header_branch
      %311 = sbr.rel (%p309) target = $region92
    $region89: #{tpu_custom_call.1} parent=1 // loop_body
      %v317 = vpack.c.bf16 %v314, %v313
      %v318 = vpack.c.bf16 %v316, %v315
      %v327 = vunpack.c.l.b16 %v228
      %v328 = vunpack.c.l.b16 %v229
      %v329 = vunpack.c.l.b16 %v230
      %v330 = vunpack.c.l.b16 %v231
      %v331 = vunpack.c.l.b16 %v232
      %v332 = vunpack.c.l.b16 %v233
      %v333 = vunpack.c.l.b16 %v234
      %v334 = vunpack.c.l.b16 %v235
      %v335 = vpack.c.b16 %v328, %v327
      %v336 = vpack.c.b16 %v330, %v329
      %v337 = vpack.c.b16 %v332, %v331
      %v338 = vpack.c.b16 %v334, %v333
      %vm339 = vcmask 261120
      %v341 = vsel %vm339, %v335, 0
      %v344 = vsel %vm339, %v336, 0
      %v347 = vsel %vm339, %v337, 0
      %v350 = vsel %vm339, %v338, 0
      %352 = vmatprep.subr.bf16.mxu0 0
      %353 = vmatpush1.bf16.msra.mxu0 0
      %354 = vmatprep.subr.bf16.mxu0 0
      %355 = vmatpush1.bf16.msra.mxu0 0
      %356 = vmatprep.subr.bf16.mxu0 0
      %357 = vmatpush1.bf16.msra.mxu0 0
      %358 = vmatprep.subr.bf16.mxu0 0
      %359 = vmatpush1.bf16.msra.mxu0 0
      %360 = vmatprep.subr.bf16.mxu0 0
      %361 = vmatpush1.bf16.msra.mxu0 0
      %362 = vmatprep.subr.bf16.mxu0 0
      %363 = vmatpush1.bf16.msra.mxu0 0
      %364 = vmatprep.subr.bf16.mxu0 0
      %365 = vmatpush1.bf16.msra.mxu0 %v318
      %366 = vmatprep.subr.bf16.mxu0 0
      %367 = vmatpush1.bf16.msra.mxu0 %v317
      %368 = vmatprep.subr.bf16.mxu0 0
      %369 = vmatpush2.bf16.msra.mxu0 0
      %370 = vmatprep.subr.bf16.mxu0 0
      %371 = vmatpush2.bf16.msra.mxu0 0
      %372 = vmatprep.subr.bf16.mxu0 0
      %373 = vmatpush2.bf16.msra.mxu0 0
      %374 = vmatprep.subr.bf16.mxu0 0
      %375 = vmatpush2.bf16.msra.mxu0 0
      %376 = vmatprep.subr.bf16.mxu0 0
      %377 = vmatpush2.bf16.msra.mxu0 0
      %378 = vmatprep.subr.bf16.mxu0 0
      %379 = vmatpush2.bf16.msra.mxu0 0
      %380 = vmatprep.subr.bf16.mxu0 0
      %381 = vmatpush2.bf16.msra.mxu0 0
      %382 = vmatprep.subr.bf16.mxu0 0
      %383 = vmatpush2.bf16.msra.mxu0 0
      %384 = vmatprep.mubr.bf16.mxu0 0
      %385 = vmatmul.mubr.bf16.gmra.mxu0 %v341
      %v386 = vpop.f32.mrf.mxu0
      %v387 = vadd.f32 0.0, %v386
      %v388 = vpop.f32.mrf.mxu0
      %v389 = vpop.f32.mrf.mxu0
      %v390 = vadd.f32 0.0, %v389
      %v391 = vpop.f32.mrf.mxu0
      %392 = vmatprep.mubr.bf16.mxu0 0
      %393 = vmatmul.mubr.bf16.gmra.mxu0 %v344
      %v394 = vpop.f32.mrf.mxu0
      %v395 = vadd.f32 0.0, %v394
      %v396 = vpop.f32.mrf.mxu0
      %v397 = vpop.f32.mrf.mxu0
      %v398 = vadd.f32 0.0, %v397
      %v399 = vpop.f32.mrf.mxu0
      %400 = vmatprep.mubr.bf16.mxu0 0
      %401 = vmatmul.mubr.bf16.gmra.mxu0 %v347
      %v402 = vpop.f32.mrf.mxu0
      %v403 = vadd.f32 0.0, %v402
      %v404 = vpop.f32.mrf.mxu0
      %v405 = vpop.f32.mrf.mxu0
      %v406 = vadd.f32 0.0, %v405
      %v407 = vpop.f32.mrf.mxu0
      %408 = vmatprep.mubr.bf16.mxu0 0
      %409 = vmatmul.mubr.bf16.gmra.mxu0 %v350
      %v410 = vpop.f32.mrf.mxu0
      %v411 = vadd.f32 0.0, %v410
      %v412 = vpop.f32.mrf.mxu0
      %v413 = vpop.f32.mrf.mxu0
      %v414 = vadd.f32 0.0, %v413
      %v415 = vpop.f32.mrf.mxu0
      %416 = vdwg.mxu0
      %v417 = vpack.c.bf16 %v390, %v387
      %v418 = vpack.c.bf16 %v398, %v395
      %v419 = vpack.c.bf16 %v406, %v403
      %v420 = vpack.c.bf16 %v414, %v411
      %v445 = vunpack.c.l.b16 %v248
      %v446 = vunpack.c.h.b16 %v248
      %v447 = vunpack.c.l.b16 %v249
      %v448 = vunpack.c.h.b16 %v249
      %v449 = vunpack.c.l.b16 %v250
      %v450 = vunpack.c.l.b16 %v251
      %v451 = vunpack.c.h.b16 %v251
      %v452 = vunpack.c.l.b16 %v252
      %v453 = vunpack.c.h.b16 %v252
      %v454 = vunpack.c.l.b16 %v253
      %v455 = vunpack.c.l.b16 %v254
      %v456 = vunpack.c.h.b16 %v254
      %v457 = vunpack.c.l.b16 %v255
      %v458 = vunpack.c.h.b16 %v255
      %v459 = vunpack.c.l.b16 %v256
      %v460 = vunpack.c.l.b16 %v257
      %v461 = vunpack.c.h.b16 %v257
      %v462 = vunpack.c.l.b16 %v258
      %v463 = vunpack.c.h.b16 %v258
      %v464 = vunpack.c.l.b16 %v259
      %v465 = vunpack.c.l.b16 %v260
      %v466 = vunpack.c.h.b16 %v260
      %v467 = vunpack.c.l.b16 %v261
      %v468 = vunpack.c.h.b16 %v261
      %v469 = vunpack.c.l.b16 %v262
      %v470 = vunpack.c.l.b16 %v263
      %v471 = vunpack.c.h.b16 %v263
      %v472 = vunpack.c.l.b16 %v264
      %v473 = vunpack.c.h.b16 %v264
      %v474 = vunpack.c.l.b16 %v265
      %v475 = vunpack.c.l.b16 %v266
      %v476 = vunpack.c.h.b16 %v266
      %v477 = vunpack.c.l.b16 %v267
      %v478 = vunpack.c.h.b16 %v267
      %v479 = vunpack.c.l.b16 %v268
      %v480 = vunpack.c.l.b16 %v269
      %v481 = vunpack.c.h.b16 %v269
      %v482 = vunpack.c.l.b16 %v270
      %v483 = vunpack.c.h.b16 %v270
      %v484 = vunpack.c.l.b16 %v271
      %v485 = vpack.c.b16 %v450, %v445
      %v486 = vpack.c.b16 %v451, %v446
      %v487 = vpack.c.b16 %v452, %v447
      %v488 = vpack.c.b16 %v453, %v448
      %v489 = vpack.c.b16 %v454, %v449
      %v490 = vpack.c.b16 %v460, %v455
      %v491 = vpack.c.b16 %v461, %v456
      %v492 = vpack.c.b16 %v462, %v457
      %v493 = vpack.c.b16 %v463, %v458
      %v494 = vpack.c.b16 %v464, %v459
      %v495 = vpack.c.b16 %v470, %v465
      %v496 = vpack.c.b16 %v471, %v466
      %v497 = vpack.c.b16 %v472, %v467
      %v498 = vpack.c.b16 %v473, %v468
      %v499 = vpack.c.b16 %v474, %v469
      %v500 = vpack.c.b16 %v480, %v475
      %v501 = vpack.c.b16 %v481, %v476
      %v502 = vpack.c.b16 %v482, %v477
      %v503 = vpack.c.b16 %v483, %v478
      %v504 = vpack.c.b16 %v484, %v479
      %vm525 = vcmask 523264
      %v527 = vsel %vm525, %v417, 0
      %v530 = vsel %vm525, %v418, 0
      %v533 = vsel %vm525, %v419, 0
      %v536 = vsel %vm525, %v420, 0
      %538 = vmatprep.subr.bf16.mxu0 0
      %539 = vmatpush1.bf16.msra.mxu0 0
      %540 = vmatprep.subr.bf16.mxu0 0
      %541 = vmatpush1.bf16.msra.mxu0 0
      %542 = vmatprep.subr.bf16.mxu0 0
      %543 = vmatpush1.bf16.msra.mxu0 0
      %544 = vmatprep.subr.bf16.mxu0 0
      %545 = vmatpush1.bf16.msra.mxu0 0
      %546 = vmatprep.subr.bf16.mxu0 %v501
      %547 = vmatpush1.bf16.msra.mxu0 %v500
      %548 = vmatprep.subr.bf16.mxu0 %v496
      %549 = vmatpush1.bf16.msra.mxu0 %v495
      %550 = vmatprep.subr.bf16.mxu0 %v491
      %551 = vmatpush1.bf16.msra.mxu0 %v490
      %552 = vmatprep.subr.bf16.mxu0 %v486
      %553 = vmatpush1.bf16.msra.mxu0 %v485
      %554 = vmatprep.subr.bf16.mxu0 0
      %555 = vmatpush2.bf16.msra.mxu0 0
      %556 = vmatprep.subr.bf16.mxu0 0
      %557 = vmatpush2.bf16.msra.mxu0 0
      %558 = vmatprep.subr.bf16.mxu0 0
      %559 = vmatpush2.bf16.msra.mxu0 0
      %560 = vmatprep.subr.bf16.mxu0 0
      %561 = vmatpush2.bf16.msra.mxu0 0
      %562 = vmatprep.subr.bf16.mxu0 0
      %563 = vmatpush2.bf16.msra.mxu0 0
      %564 = vmatprep.subr.bf16.mxu0 0
      %565 = vmatpush2.bf16.msra.mxu0 0
      %566 = vmatprep.subr.bf16.mxu0 0
      %567 = vmatpush2.bf16.msra.mxu0 0
      %568 = vmatprep.subr.bf16.mxu0 0
      %569 = vmatpush2.bf16.msra.mxu0 0
      %570 = vmatprep.mubr.bf16.mxu0 0
      %571 = vmatmul.mubr.bf16.gmra.mxu0 %v527
      %v572 = vpop.f32.mrf.mxu0
      %v573 = vadd.f32 0.0, %v572
      %v574 = vpop.f32.mrf.mxu0
      %v575 = vadd.f32 0.0, %v574
      %v576 = vpop.f32.mrf.mxu0
      %v577 = vadd.f32 0.0, %v576
      %v578 = vpop.f32.mrf.mxu0
      %v579 = vadd.f32 0.0, %v578
      %580 = vmatprep.mubr.bf16.mxu0 0
      %581 = vmatmul.mubr.bf16.gmra.mxu0 %v530
      %v582 = vpop.f32.mrf.mxu0
      %v583 = vadd.f32 0.0, %v582
      %v584 = vpop.f32.mrf.mxu0
      %v585 = vadd.f32 0.0, %v584
      %v586 = vpop.f32.mrf.mxu0
      %v587 = vadd.f32 0.0, %v586
      %v588 = vpop.f32.mrf.mxu0
      %v589 = vadd.f32 0.0, %v588
      %590 = vmatprep.mubr.bf16.mxu0 0
      %591 = vmatmul.mubr.bf16.gmra.mxu0 %v533
      %v592 = vpop.f32.mrf.mxu0
      %v593 = vadd.f32 0.0, %v592
      %v594 = vpop.f32.mrf.mxu0
      %v595 = vadd.f32 0.0, %v594
      %v596 = vpop.f32.mrf.mxu0
      %v597 = vadd.f32 0.0, %v596
      %v598 = vpop.f32.mrf.mxu0
      %v599 = vadd.f32 0.0, %v598
      %600 = vmatprep.mubr.bf16.mxu0 0
      %601 = vmatmul.mubr.bf16.gmra.mxu0 %v536
      %v602 = vpop.f32.mrf.mxu0
      %v603 = vadd.f32 0.0, %v602
      %v604 = vpop.f32.mrf.mxu0
      %v605 = vadd.f32 0.0, %v604
      %v606 = vpop.f32.mrf.mxu0
      %v607 = vadd.f32 0.0, %v606
      %v608 = vpop.f32.mrf.mxu0
      %v609 = vadd.f32 0.0, %v608
      %610 = vdwg.mxu0
      %611 = vmatprep.subr.bf16.mxu0 0
      %612 = vmatpush1.bf16.msra.mxu0 0
      %613 = vmatprep.subr.bf16.mxu0 0
      %614 = vmatpush1.bf16.msra.mxu0 0
      %615 = vmatprep.subr.bf16.mxu0 0
      %616 = vmatpush1.bf16.msra.mxu0 0
      %617 = vmatprep.subr.bf16.mxu0 0
      %618 = vmatpush1.bf16.msra.mxu0 0
      %619 = vmatprep.subr.bf16.mxu0 %v503
      %620 = vmatpush1.bf16.msra.mxu0 %v502
      %621 = vmatprep.subr.bf16.mxu0 %v498
      %622 = vmatpush1.bf16.msra.mxu0 %v497
      %623 = vmatprep.subr.bf16.mxu0 %v493
      %624 = vmatpush1.bf16.msra.mxu0 %v492
      %625 = vmatprep.subr.bf16.mxu0 %v488
      %626 = vmatpush1.bf16.msra.mxu0 %v487
      %627 = vmatprep.subr.bf16.mxu0 0
      %628 = vmatpush2.bf16.msra.mxu0 0
      %629 = vmatprep.subr.bf16.mxu0 0
      %630 = vmatpush2.bf16.msra.mxu0 0
      %631 = vmatprep.subr.bf16.mxu0 0
      %632 = vmatpush2.bf16.msra.mxu0 0
      %633 = vmatprep.subr.bf16.mxu0 0
      %634 = vmatpush2.bf16.msra.mxu0 0
      %635 = vmatprep.subr.bf16.mxu0 0
      %636 = vmatpush2.bf16.msra.mxu0 0
      %637 = vmatprep.subr.bf16.mxu0 0
      %638 = vmatpush2.bf16.msra.mxu0 0
      %639 = vmatprep.subr.bf16.mxu0 0
      %640 = vmatpush2.bf16.msra.mxu0 0
      %641 = vmatprep.subr.bf16.mxu0 0
      %642 = vmatpush2.bf16.msra.mxu0 0
      %643 = vmatprep.mubr.bf16.mxu0 0
      %644 = vmatmul.mubr.bf16.gmra.mxu0 %v527
      %v645 = vpop.f32.mrf.mxu0
      %v646 = vadd.f32 0.0, %v645
      %v647 = vpop.f32.mrf.mxu0
      %v648 = vadd.f32 0.0, %v647
      %v649 = vpop.f32.mrf.mxu0
      %v650 = vadd.f32 0.0, %v649
      %v651 = vpop.f32.mrf.mxu0
      %v652 = vadd.f32 0.0, %v651
      %653 = vmatprep.mubr.bf16.mxu0 0
      %654 = vmatmul.mubr.bf16.gmra.mxu0 %v530
      %v655 = vpop.f32.mrf.mxu0
      %v656 = vadd.f32 0.0, %v655
      %v657 = vpop.f32.mrf.mxu0
      %v658 = vadd.f32 0.0, %v657
      %v659 = vpop.f32.mrf.mxu0
      %v660 = vadd.f32 0.0, %v659
      %v661 = vpop.f32.mrf.mxu0
      %v662 = vadd.f32 0.0, %v661
      %663 = vmatprep.mubr.bf16.mxu0 0
      %664 = vmatmul.mubr.bf16.gmra.mxu0 %v533
      %v665 = vpop.f32.mrf.mxu0
      %v666 = vadd.f32 0.0, %v665
      %v667 = vpop.f32.mrf.mxu0
      %v668 = vadd.f32 0.0, %v667
      %v669 = vpop.f32.mrf.mxu0
      %v670 = vadd.f32 0.0, %v669
      %v671 = vpop.f32.mrf.mxu0
      %v672 = vadd.f32 0.0, %v671
      %673 = vmatprep.mubr.bf16.mxu0 0
      %674 = vmatmul.mubr.bf16.gmra.mxu0 %v536
      %v675 = vpop.f32.mrf.mxu0
      %v676 = vadd.f32 0.0, %v675
      %v677 = vpop.f32.mrf.mxu0
      %v678 = vadd.f32 0.0, %v677
      %v679 = vpop.f32.mrf.mxu0
      %v680 = vadd.f32 0.0, %v679
      %v681 = vpop.f32.mrf.mxu0
      %v682 = vadd.f32 0.0, %v681
      %683 = vdwg.mxu0
      %684 = vmatprep.subr.bf16.mxu0 0
      %685 = vmatpush1.bf16.msra.mxu0 0
      %686 = vmatprep.subr.bf16.mxu0 0
      %687 = vmatpush1.bf16.msra.mxu0 0
      %688 = vmatprep.subr.bf16.mxu0 0
      %689 = vmatpush1.bf16.msra.mxu0 0
      %690 = vmatprep.subr.bf16.mxu0 0
      %691 = vmatpush1.bf16.msra.mxu0 0
      %692 = vmatprep.subr.bf16.mxu0 0
      %693 = vmatpush1.bf16.msra.mxu0 %v504
      %694 = vmatprep.subr.bf16.mxu0 0
      %695 = vmatpush1.bf16.msra.mxu0 %v499
      %696 = vmatprep.subr.bf16.mxu0 0
      %697 = vmatpush1.bf16.msra.mxu0 %v494
      %698 = vmatprep.subr.bf16.mxu0 0
      %699 = vmatpush1.bf16.msra.mxu0 %v489
      %700 = vmatprep.subr.bf16.mxu0 0
      %701 = vmatpush2.bf16.msra.mxu0 0
      %702 = vmatprep.subr.bf16.mxu0 0
      %703 = vmatpush2.bf16.msra.mxu0 0
      %704 = vmatprep.subr.bf16.mxu0 0
      %705 = vmatpush2.bf16.msra.mxu0 0
      %706 = vmatprep.subr.bf16.mxu0 0
      %707 = vmatpush2.bf16.msra.mxu0 0
      %708 = vmatprep.subr.bf16.mxu0 0
      %709 = vmatpush2.bf16.msra.mxu0 0
      %710 = vmatprep.subr.bf16.mxu0 0
      %711 = vmatpush2.bf16.msra.mxu0 0
      %712 = vmatprep.subr.bf16.mxu0 0
      %713 = vmatpush2.bf16.msra.mxu0 0
      %714 = vmatprep.subr.bf16.mxu0 0
      %715 = vmatpush2.bf16.msra.mxu0 0
      %716 = vmatprep.mubr.bf16.mxu0 0
      %717 = vmatmul.mubr.bf16.gmra.mxu0 %v527
      %v718 = vpop.f32.mrf.mxu0
      %v719 = vadd.f32 0.0, %v718
      %v720 = vpop.f32.mrf.mxu0
      %v721 = vpop.f32.mrf.mxu0
      %v722 = vadd.f32 0.0, %v721
      %v723 = vpop.f32.mrf.mxu0
      %724 = vmatprep.mubr.bf16.mxu0 0
      %725 = vmatmul.mubr.bf16.gmra.mxu0 %v530
      %v726 = vpop.f32.mrf.mxu0
      %v727 = vadd.f32 0.0, %v726
      %v728 = vpop.f32.mrf.mxu0
      %v729 = vpop.f32.mrf.mxu0
      %v730 = vadd.f32 0.0, %v729
      %v731 = vpop.f32.mrf.mxu0
      %732 = vmatprep.mubr.bf16.mxu0 0
      %733 = vmatmul.mubr.bf16.gmra.mxu0 %v533
      %v734 = vpop.f32.mrf.mxu0
      %v735 = vadd.f32 0.0, %v734
      %v736 = vpop.f32.mrf.mxu0
      %v737 = vpop.f32.mrf.mxu0
      %v738 = vadd.f32 0.0, %v737
      %v739 = vpop.f32.mrf.mxu0
      %740 = vmatprep.mubr.bf16.mxu0 0
      %741 = vmatmul.mubr.bf16.gmra.mxu0 %v536
      %v742 = vpop.f32.mrf.mxu0
      %v743 = vadd.f32 0.0, %v742
      %v744 = vpop.f32.mrf.mxu0
      %v745 = vpop.f32.mrf.mxu0
      %v746 = vadd.f32 0.0, %v745
      %v747 = vpop.f32.mrf.mxu0
      %748 = vdwg.mxu0
      %750 = vset.pattern.permute.xlu0 0
      %751 = vperm.xlu0 %750, %v240
      %v752 = vpop.permute.xlu0 %751
      %755 = vset.pattern.permute.xlu0 0
      %756 = vperm.xlu0 %755, %v241
      %v757 = vpop.permute.xlu0 %756
      %760 = vset.pattern.permute.xlu0 0
      %761 = vperm.xlu0 %760, %v242
      %v762 = vpop.permute.xlu0 %761
      %765 = vset.pattern.permute.xlu0 0
      %766 = vperm.xlu0 %765, %v243
      %v767 = vpop.permute.xlu0 %766
      %770 = vset.pattern.permute.xlu0 0
      %771 = vperm.xlu0 %770, %v244
      %v772 = vpop.permute.xlu0 %771
      %775 = vset.pattern.permute.xlu0 0
      %776 = vperm.xlu0 %775, %v245
      %v777 = vpop.permute.xlu0 %776
      %780 = vset.pattern.permute.xlu0 0
      %781 = vperm.xlu0 %780, %v246
      %v782 = vpop.permute.xlu0 %781
      %785 = vset.pattern.permute.xlu0 0
      %786 = vperm.xlu0 %785, %v247
      %v787 = vpop.permute.xlu0 %786
      %v789 = vmul.f32 %v752, %v573
      %v790 = vmul.f32 %v757, %v577
      %v791 = vmul.f32 %v762, %v583
      %v792 = vmul.f32 %v767, %v587
      %v793 = vmul.f32 %v772, %v593
      %v794 = vmul.f32 %v777, %v597
      %v795 = vmul.f32 %v782, %v603
      %v796 = vmul.f32 %v787, %v607
      %805 = vrot.lane.b32.xlu0 %v789, 64
      %v806 = vpop.permute.xlu0 %805
      %807 = vrot.lane.b32.xlu0 %v790, 64
      %v808 = vpop.permute.xlu0 %807
      %809 = vrot.lane.b32.xlu0 %v791, 64
      %v810 = vpop.permute.xlu0 %809
      %811 = vrot.lane.b32.xlu0 %v792, 64
      %v812 = vpop.permute.xlu0 %811
      %813 = vrot.lane.b32.xlu0 %v793, 64
      %v814 = vpop.permute.xlu0 %813
      %815 = vrot.lane.b32.xlu0 %v794, 64
      %v816 = vpop.permute.xlu0 %815
      %817 = vrot.lane.b32.xlu0 %v795, 64
      %v818 = vpop.permute.xlu0 %817
      %819 = vrot.lane.b32.xlu0 %v796, 64
      %v820 = vpop.permute.xlu0 %819
      %v829 = vadd.f32 %v573, %v806
      %v830 = vadd.f32 %v577, %v808
      %v831 = vadd.f32 %v583, %v810
      %v832 = vadd.f32 %v587, %v812
      %v833 = vadd.f32 %v593, %v814
      %v834 = vadd.f32 %v597, %v816
      %v835 = vadd.f32 %v603, %v818
      %v836 = vadd.f32 %v607, %v820
      %837 = vset.pattern.permute.xlu0 1
      %838 = vperm.xlu0 %837, %v240
      %v839 = vpop.permute.xlu0 %838
      %841 = vset.pattern.permute.xlu0 1
      %842 = vperm.xlu0 %841, %v241
      %v843 = vpop.permute.xlu0 %842
      %845 = vset.pattern.permute.xlu0 1
      %846 = vperm.xlu0 %845, %v242
      %v847 = vpop.permute.xlu0 %846
      %849 = vset.pattern.permute.xlu0 1
      %850 = vperm.xlu0 %849, %v243
      %v851 = vpop.permute.xlu0 %850
      %853 = vset.pattern.permute.xlu0 1
      %854 = vperm.xlu0 %853, %v244
      %v855 = vpop.permute.xlu0 %854
      %857 = vset.pattern.permute.xlu0 1
      %858 = vperm.xlu0 %857, %v245
      %v859 = vpop.permute.xlu0 %858
      %861 = vset.pattern.permute.xlu0 1
      %862 = vperm.xlu0 %861, %v246
      %v863 = vpop.permute.xlu0 %862
      %865 = vset.pattern.permute.xlu0 1
      %866 = vperm.xlu0 %865, %v247
      %v867 = vpop.permute.xlu0 %866
      %v869 = vmul.f32 %v839, %v575
      %v870 = vmul.f32 %v843, %v579
      %v871 = vmul.f32 %v847, %v585
      %v872 = vmul.f32 %v851, %v589
      %v873 = vmul.f32 %v855, %v595
      %v874 = vmul.f32 %v859, %v599
      %v875 = vmul.f32 %v863, %v605
      %v876 = vmul.f32 %v867, %v609
      %v877 = vadd.f32 %v829, %v869
      %v878 = vadd.f32 %v830, %v870
      %v879 = vadd.f32 %v831, %v871
      %v880 = vadd.f32 %v832, %v872
      %v881 = vadd.f32 %v833, %v873
      %v882 = vadd.f32 %v834, %v874
      %v883 = vadd.f32 %v835, %v875
      %v884 = vadd.f32 %v836, %v876
      %885 = vset.pattern.permute.xlu0 2
      %886 = vperm.xlu0 %885, %v240
      %v887 = vpop.permute.xlu0 %886
      %889 = vset.pattern.permute.xlu0 2
      %890 = vperm.xlu0 %889, %v241
      %v891 = vpop.permute.xlu0 %890
      %893 = vset.pattern.permute.xlu0 2
      %894 = vperm.xlu0 %893, %v242
      %v895 = vpop.permute.xlu0 %894
      %897 = vset.pattern.permute.xlu0 2
      %898 = vperm.xlu0 %897, %v243
      %v899 = vpop.permute.xlu0 %898
      %901 = vset.pattern.permute.xlu0 2
      %902 = vperm.xlu0 %901, %v244
      %v903 = vpop.permute.xlu0 %902
      %905 = vset.pattern.permute.xlu0 2
      %906 = vperm.xlu0 %905, %v245
      %v907 = vpop.permute.xlu0 %906
      %909 = vset.pattern.permute.xlu0 2
      %910 = vperm.xlu0 %909, %v246
      %v911 = vpop.permute.xlu0 %910
      %913 = vset.pattern.permute.xlu0 2
      %914 = vperm.xlu0 %913, %v247
      %v915 = vpop.permute.xlu0 %914
      %v917 = vmul.f32 %v887, %v575
      %v918 = vmul.f32 %v891, %v579
      %v919 = vmul.f32 %v895, %v585
      %v920 = vmul.f32 %v899, %v589
      %v921 = vmul.f32 %v903, %v595
      %v922 = vmul.f32 %v907, %v599
      %v923 = vmul.f32 %v911, %v605
      %v924 = vmul.f32 %v915, %v609
      %933 = vrot.lane.b32.xlu0 %v917, 64
      %v934 = vpop.permute.xlu0 %933
      %935 = vrot.lane.b32.xlu0 %v918, 64
      %v936 = vpop.permute.xlu0 %935
      %937 = vrot.lane.b32.xlu0 %v919, 64
      %v938 = vpop.permute.xlu0 %937
      %939 = vrot.lane.b32.xlu0 %v920, 64
      %v940 = vpop.permute.xlu0 %939
      %941 = vrot.lane.b32.xlu0 %v921, 64
      %v942 = vpop.permute.xlu0 %941
      %943 = vrot.lane.b32.xlu0 %v922, 64
      %v944 = vpop.permute.xlu0 %943
      %945 = vrot.lane.b32.xlu0 %v923, 64
      %v946 = vpop.permute.xlu0 %945
      %947 = vrot.lane.b32.xlu0 %v924, 64
      %v948 = vpop.permute.xlu0 %947
      %v957 = vadd.f32 %v877, %v934
      %v958 = vadd.f32 %v878, %v936
      %v959 = vadd.f32 %v879, %v938
      %v960 = vadd.f32 %v880, %v940
      %v961 = vadd.f32 %v881, %v942
      %v962 = vadd.f32 %v882, %v944
      %v963 = vadd.f32 %v883, %v946
      %v964 = vadd.f32 %v884, %v948
      %965 = vset.pattern.permute.xlu0 3
      %966 = vperm.xlu0 %965, %v240
      %v967 = vpop.permute.xlu0 %966
      %969 = vset.pattern.permute.xlu0 3
      %970 = vperm.xlu0 %969, %v241
      %v971 = vpop.permute.xlu0 %970
      %973 = vset.pattern.permute.xlu0 3
      %974 = vperm.xlu0 %973, %v242
      %v975 = vpop.permute.xlu0 %974
      %977 = vset.pattern.permute.xlu0 3
      %978 = vperm.xlu0 %977, %v243
      %v979 = vpop.permute.xlu0 %978
      %981 = vset.pattern.permute.xlu0 3
      %982 = vperm.xlu0 %981, %v244
      %v983 = vpop.permute.xlu0 %982
      %985 = vset.pattern.permute.xlu0 3
      %986 = vperm.xlu0 %985, %v245
      %v987 = vpop.permute.xlu0 %986
      %989 = vset.pattern.permute.xlu0 3
      %990 = vperm.xlu0 %989, %v246
      %v991 = vpop.permute.xlu0 %990
      %993 = vset.pattern.permute.xlu0 3
      %994 = vperm.xlu0 %993, %v247
      %v995 = vpop.permute.xlu0 %994
      %v997 = vmul.f32 %v967, %v646
      %v998 = vmul.f32 %v971, %v650
      %v999 = vmul.f32 %v975, %v656
      %v1000 = vmul.f32 %v979, %v660
      %v1001 = vmul.f32 %v983, %v666
      %v1002 = vmul.f32 %v987, %v670
      %v1003 = vmul.f32 %v991, %v676
      %v1004 = vmul.f32 %v995, %v680
      %v1005 = vadd.f32 %v957, %v997
      %v1006 = vadd.f32 %v958, %v998
      %v1007 = vadd.f32 %v959, %v999
      %v1008 = vadd.f32 %v960, %v1000
      %v1009 = vadd.f32 %v961, %v1001
      %v1010 = vadd.f32 %v962, %v1002
      %v1011 = vadd.f32 %v963, %v1003
      %v1012 = vadd.f32 %v964, %v1004
      %1013 = vset.pattern.permute.xlu0 4
      %1014 = vperm.xlu0 %1013, %v240
      %v1015 = vpop.permute.xlu0 %1014
      %1017 = vset.pattern.permute.xlu0 4
      %1018 = vperm.xlu0 %1017, %v241
      %v1019 = vpop.permute.xlu0 %1018
      %1021 = vset.pattern.permute.xlu0 4
      %1022 = vperm.xlu0 %1021, %v242
      %v1023 = vpop.permute.xlu0 %1022
      %1025 = vset.pattern.permute.xlu0 4
      %1026 = vperm.xlu0 %1025, %v243
      %v1027 = vpop.permute.xlu0 %1026
      %1029 = vset.pattern.permute.xlu0 4
      %1030 = vperm.xlu0 %1029, %v244
      %v1031 = vpop.permute.xlu0 %1030
      %1033 = vset.pattern.permute.xlu0 4
      %1034 = vperm.xlu0 %1033, %v245
      %v1035 = vpop.permute.xlu0 %1034
      %1037 = vset.pattern.permute.xlu0 4
      %1038 = vperm.xlu0 %1037, %v246
      %v1039 = vpop.permute.xlu0 %1038
      %1041 = vset.pattern.permute.xlu0 4
      %1042 = vperm.xlu0 %1041, %v247
      %v1043 = vpop.permute.xlu0 %1042
      %v1045 = vmul.f32 %v1015, %v646
      %v1046 = vmul.f32 %v1019, %v650
      %v1047 = vmul.f32 %v1023, %v656
      %v1048 = vmul.f32 %v1027, %v660
      %v1049 = vmul.f32 %v1031, %v666
      %v1050 = vmul.f32 %v1035, %v670
      %v1051 = vmul.f32 %v1039, %v676
      %v1052 = vmul.f32 %v1043, %v680
      %1061 = vrot.lane.b32.xlu0 %v1045, 64
      %v1062 = vpop.permute.xlu0 %1061
      %1063 = vrot.lane.b32.xlu0 %v1046, 64
      %v1064 = vpop.permute.xlu0 %1063
      %1065 = vrot.lane.b32.xlu0 %v1047, 64
      %v1066 = vpop.permute.xlu0 %1065
      %1067 = vrot.lane.b32.xlu0 %v1048, 64
      %v1068 = vpop.permute.xlu0 %1067
      %1069 = vrot.lane.b32.xlu0 %v1049, 64
      %v1070 = vpop.permute.xlu0 %1069
      %1071 = vrot.lane.b32.xlu0 %v1050, 64
      %v1072 = vpop.permute.xlu0 %1071
      %1073 = vrot.lane.b32.xlu0 %v1051, 64
      %v1074 = vpop.permute.xlu0 %1073
      %1075 = vrot.lane.b32.xlu0 %v1052, 64
      %v1076 = vpop.permute.xlu0 %1075
      %v1085 = vadd.f32 %v1005, %v1062
      %v1086 = vadd.f32 %v1006, %v1064
      %v1087 = vadd.f32 %v1007, %v1066
      %v1088 = vadd.f32 %v1008, %v1068
      %v1089 = vadd.f32 %v1009, %v1070
      %v1090 = vadd.f32 %v1010, %v1072
      %v1091 = vadd.f32 %v1011, %v1074
      %v1092 = vadd.f32 %v1012, %v1076
      %1093 = vset.pattern.permute.xlu0 5
      %1094 = vperm.xlu0 %1093, %v240
      %v1095 = vpop.permute.xlu0 %1094
      %1097 = vset.pattern.permute.xlu0 5
      %1098 = vperm.xlu0 %1097, %v241
      %v1099 = vpop.permute.xlu0 %1098
      %1101 = vset.pattern.permute.xlu0 5
      %1102 = vperm.xlu0 %1101, %v242
      %v1103 = vpop.permute.xlu0 %1102
      %1105 = vset.pattern.permute.xlu0 5
      %1106 = vperm.xlu0 %1105, %v243
      %v1107 = vpop.permute.xlu0 %1106
      %1109 = vset.pattern.permute.xlu0 5
      %1110 = vperm.xlu0 %1109, %v244
      %v1111 = vpop.permute.xlu0 %1110
      %1113 = vset.pattern.permute.xlu0 5
      %1114 = vperm.xlu0 %1113, %v245
      %v1115 = vpop.permute.xlu0 %1114
      %1117 = vset.pattern.permute.xlu0 5
      %1118 = vperm.xlu0 %1117, %v246
      %v1119 = vpop.permute.xlu0 %1118
      %1121 = vset.pattern.permute.xlu0 5
      %1122 = vperm.xlu0 %1121, %v247
      %v1123 = vpop.permute.xlu0 %1122
      %v1125 = vmul.f32 %v1095, %v648
      %v1126 = vmul.f32 %v1099, %v652
      %v1127 = vmul.f32 %v1103, %v658
      %v1128 = vmul.f32 %v1107, %v662
      %v1129 = vmul.f32 %v1111, %v668
      %v1130 = vmul.f32 %v1115, %v672
      %v1131 = vmul.f32 %v1119, %v678
      %v1132 = vmul.f32 %v1123, %v682
      %v1133 = vadd.f32 %v1085, %v1125
      %v1134 = vadd.f32 %v1086, %v1126
      %v1135 = vadd.f32 %v1087, %v1127
      %v1136 = vadd.f32 %v1088, %v1128
      %v1137 = vadd.f32 %v1089, %v1129
      %v1138 = vadd.f32 %v1090, %v1130
      %v1139 = vadd.f32 %v1091, %v1131
      %v1140 = vadd.f32 %v1092, %v1132
      %1141 = vset.pattern.permute.xlu0 6
      %1142 = vperm.xlu0 %1141, %v240
      %v1143 = vpop.permute.xlu0 %1142
      %1145 = vset.pattern.permute.xlu0 6
      %1146 = vperm.xlu0 %1145, %v241
      %v1147 = vpop.permute.xlu0 %1146
      %1149 = vset.pattern.permute.xlu0 6
      %1150 = vperm.xlu0 %1149, %v242
      %v1151 = vpop.permute.xlu0 %1150
      %1153 = vset.pattern.permute.xlu0 6
      %1154 = vperm.xlu0 %1153, %v243
      %v1155 = vpop.permute.xlu0 %1154
      %1157 = vset.pattern.permute.xlu0 6
      %1158 = vperm.xlu0 %1157, %v244
      %v1159 = vpop.permute.xlu0 %1158
      %1161 = vset.pattern.permute.xlu0 6
      %1162 = vperm.xlu0 %1161, %v245
      %v1163 = vpop.permute.xlu0 %1162
      %1165 = vset.pattern.permute.xlu0 6
      %1166 = vperm.xlu0 %1165, %v246
      %v1167 = vpop.permute.xlu0 %1166
      %1169 = vset.pattern.permute.xlu0 6
      %1170 = vperm.xlu0 %1169, %v247
      %v1171 = vpop.permute.xlu0 %1170
      %v1173 = vmul.f32 %v1143, %v648
      %v1174 = vmul.f32 %v1147, %v652
      %v1175 = vmul.f32 %v1151, %v658
      %v1176 = vmul.f32 %v1155, %v662
      %v1177 = vmul.f32 %v1159, %v668
      %v1178 = vmul.f32 %v1163, %v672
      %v1179 = vmul.f32 %v1167, %v678
      %v1180 = vmul.f32 %v1171, %v682
      %1189 = vrot.lane.b32.xlu0 %v1173, 64
      %v1190 = vpop.permute.xlu0 %1189
      %1191 = vrot.lane.b32.xlu0 %v1174, 64
      %v1192 = vpop.permute.xlu0 %1191
      %1193 = vrot.lane.b32.xlu0 %v1175, 64
      %v1194 = vpop.permute.xlu0 %1193
      %1195 = vrot.lane.b32.xlu0 %v1176, 64
      %v1196 = vpop.permute.xlu0 %1195
      %1197 = vrot.lane.b32.xlu0 %v1177, 64
      %v1198 = vpop.permute.xlu0 %1197
      %1199 = vrot.lane.b32.xlu0 %v1178, 64
      %v1200 = vpop.permute.xlu0 %1199
      %1201 = vrot.lane.b32.xlu0 %v1179, 64
      %v1202 = vpop.permute.xlu0 %1201
      %1203 = vrot.lane.b32.xlu0 %v1180, 64
      %v1204 = vpop.permute.xlu0 %1203
      %v1213 = vadd.f32 %v1133, %v1190
      %v1214 = vadd.f32 %v1134, %v1192
      %v1215 = vadd.f32 %v1135, %v1194
      %v1216 = vadd.f32 %v1136, %v1196
      %v1217 = vadd.f32 %v1137, %v1198
      %v1218 = vadd.f32 %v1138, %v1200
      %v1219 = vadd.f32 %v1139, %v1202
      %v1220 = vadd.f32 %v1140, %v1204
      %1221 = vset.pattern.permute.xlu0 7
      %1222 = vperm.xlu0 %1221, %v240
      %v1223 = vpop.permute.xlu0 %1222
      %1225 = vset.pattern.permute.xlu0 7
      %1226 = vperm.xlu0 %1225, %v241
      %v1227 = vpop.permute.xlu0 %1226
      %1229 = vset.pattern.permute.xlu0 7
      %1230 = vperm.xlu0 %1229, %v242
      %v1231 = vpop.permute.xlu0 %1230
      %1233 = vset.pattern.permute.xlu0 7
      %1234 = vperm.xlu0 %1233, %v243
      %v1235 = vpop.permute.xlu0 %1234
      %1237 = vset.pattern.permute.xlu0 7
      %1238 = vperm.xlu0 %1237, %v244
      %v1239 = vpop.permute.xlu0 %1238
      %1241 = vset.pattern.permute.xlu0 7
      %1242 = vperm.xlu0 %1241, %v245
      %v1243 = vpop.permute.xlu0 %1242
      %1245 = vset.pattern.permute.xlu0 7
      %1246 = vperm.xlu0 %1245, %v246
      %v1247 = vpop.permute.xlu0 %1246
      %1249 = vset.pattern.permute.xlu0 7
      %1250 = vperm.xlu0 %1249, %v247
      %v1251 = vpop.permute.xlu0 %1250
      %v1253 = vmul.f32 %v1223, %v719
      %v1254 = vmul.f32 %v1227, %v722
      %v1255 = vmul.f32 %v1231, %v727
      %v1256 = vmul.f32 %v1235, %v730
      %v1257 = vmul.f32 %v1239, %v735
      %v1258 = vmul.f32 %v1243, %v738
      %v1259 = vmul.f32 %v1247, %v743
      %v1260 = vmul.f32 %v1251, %v746
      %v1261 = vadd.f32 %v1213, %v1253
      %v1262 = vadd.f32 %v1214, %v1254
      %v1263 = vadd.f32 %v1215, %v1255
      %v1264 = vadd.f32 %v1216, %v1256
      %v1265 = vadd.f32 %v1217, %v1257
      %v1266 = vadd.f32 %v1218, %v1258
      %v1267 = vadd.f32 %v1219, %v1259
      %v1268 = vadd.f32 %v1220, %v1260
      %v1269 = vpack.c.bf16 %v1262, %v1261
      %v1270 = vpack.c.bf16 %v1264, %v1263
      %v1271 = vpack.c.bf16 %v1266, %v1265
      %v1272 = vpack.c.bf16 %v1268, %v1267
      %v1274 = vlaneseq
      %v1275 = vshrl.u32 %v1274, 7
      %v1276 = vsub.s32 0, %v1275
      %v1277 = vrot.slane %v272, %v1276
      %v1283 = vunpack.c.l.b16 %v236
      %v1284 = vunpack.c.l.b16 %v237
      %v1285 = vunpack.c.l.b16 %v238
      %v1286 = vunpack.c.l.b16 %v239
      %v1287 = vpack.c.b16 %v1284, %v1283
      %v1288 = vpack.c.b16 %v1286, %v1285
      %v1290 = vsel %vm525, %v1287, 0
      %v1293 = vsel %vm525, %v1288, 0
      %1295 = vmatprep.subr.bf16.mxu0 0
      %1296 = vmatpush1.bf16.msra.mxu0 0
      %1297 = vmatprep.subr.bf16.mxu0 0
      %1298 = vmatpush1.bf16.msra.mxu0 0
      %1299 = vmatprep.subr.bf16.mxu0 0
      %1300 = vmatpush1.bf16.msra.mxu0 0
      %1301 = vmatprep.subr.bf16.mxu0 0
      %1302 = vmatpush1.bf16.msra.mxu0 0
      %1303 = vmatprep.subr.bf16.mxu0 0
      %1304 = vmatpush1.bf16.msra.mxu0 %v1272
      %1305 = vmatprep.subr.bf16.mxu0 0
      %1306 = vmatpush1.bf16.msra.mxu0 %v1271
      %1307 = vmatprep.subr.bf16.mxu0 0
      %1308 = vmatpush1.bf16.msra.mxu0 %v1270
      %1309 = vmatprep.subr.bf16.mxu0 0
      %1310 = vmatpush1.bf16.msra.mxu0 %v1269
      %1311 = vmatprep.subr.bf16.mxu0 0
      %1312 = vmatpush2.bf16.msra.mxu0 0
      %1313 = vmatprep.subr.bf16.mxu0 0
      %1314 = vmatpush2.bf16.msra.mxu0 0
      %1315 = vmatprep.subr.bf16.mxu0 0
      %1316 = vmatpush2.bf16.msra.mxu0 0
      %1317 = vmatprep.subr.bf16.mxu0 0
      %1318 = vmatpush2.bf16.msra.mxu0 0
      %1319 = vmatprep.subr.bf16.mxu0 0
      %1320 = vmatpush2.bf16.msra.mxu0 0
      %1321 = vmatprep.subr.bf16.mxu0 0
      %1322 = vmatpush2.bf16.msra.mxu0 0
      %1323 = vmatprep.subr.bf16.mxu0 0
      %1324 = vmatpush2.bf16.msra.mxu0 0
      %1325 = vmatprep.subr.bf16.mxu0 0
      %1326 = vmatpush2.bf16.msra.mxu0 0
      %1327 = vmatprep.mubr.bf16.mxu0 0
      %1328 = vmatmul.mubr.bf16.gmra.mxu0 %v1290
      %v1329 = vpop.f32.mrf.mxu0
      %v1330 = vadd.f32 %v1277, %v1329
      %v1331 = vpop.f32.mrf.mxu0
      %v1332 = vpop.f32.mrf.mxu0
      %v1333 = vadd.f32 %v1277, %v1332
      %v1334 = vpop.f32.mrf.mxu0
      %1335 = vmatprep.mubr.bf16.mxu0 0
      %1336 = vmatmul.mubr.bf16.gmra.mxu0 %v1293
      %v1337 = vpop.f32.mrf.mxu0
      %v1338 = vadd.f32 %v1277, %v1337
      %v1339 = vpop.f32.mrf.mxu0
      %v1340 = vpop.f32.mrf.mxu0
      %v1341 = vadd.f32 %v1277, %v1340
      %v1342 = vpop.f32.mrf.mxu0
      %1343 = vdwg.mxu0
      %v1344 = vmax.f32 %v1330, 0.0
      %v1345 = vmax.f32 %v1333, 0.0
      %v1346 = vmax.f32 %v1338, 0.0
      %v1347 = vmax.f32 %v1341, 0.0
      %1352 = vrot.lane.b32.xlu0 %v313, 64
      %v1353 = vpop.permute.xlu0 %1352
      %1354 = vrot.lane.b32.xlu0 %v314, 64
      %v1355 = vpop.permute.xlu0 %1354
      %1356 = vrot.lane.b32.xlu0 %v315, 64
      %v1357 = vpop.permute.xlu0 %1356
      %1358 = vrot.lane.b32.xlu0 %v316, 64
      %v1359 = vpop.permute.xlu0 %1358
      %v1364 = vsel %vm525, %v1344, %v1353
      %v1365 = vsel %vm525, %v1345, %v1355
      %v1366 = vsel %vm525, %v1346, %v1357
      %v1367 = vsel %vm525, %v1347, %v1359
      %v1369 = vlaneseq
      %v1370 = vshrl.u32 %v1369, 7
      %v1371 = vsub.s32 0, %v1370
      %v1372 = vrot.slane %v289, %v1371
      %1374 = vmatprep.subr.mxu0 0.0
      %1375 = vmatpush1.msra.mxu0 %v288
      %1376 = vmatprep.subr.mxu0 0.0
      %1377 = vmatpush1.msra.mxu0 %v287
      %1378 = vmatprep.subr.mxu0 0.0
      %1379 = vmatpush1.msra.mxu0 %v286
      %1380 = vmatprep.subr.mxu0 0.0
      %1381 = vmatpush1.msra.mxu0 %v285
      %1382 = vmatprep.subr.mxu0 0.0
      %1383 = vmatpush1.msra.mxu0 %v284
      %1384 = vmatprep.subr.mxu0 0.0
      %1385 = vmatpush1.msra.mxu0 %v283
      %1386 = vmatprep.subr.mxu0 0.0
      %1387 = vmatpush1.msra.mxu0 %v282
      %1388 = vmatprep.subr.mxu0 0.0
      %1389 = vmatpush1.msra.mxu0 %v281
      %1390 = vmatprep.subr.mxu0 0.0
      %1391 = vmatpush1.msra.mxu0 %v280
      %1392 = vmatprep.subr.mxu0 0.0
      %1393 = vmatpush1.msra.mxu0 %v279
      %1394 = vmatprep.subr.mxu0 0.0
      %1395 = vmatpush1.msra.mxu0 %v278
      %1396 = vmatprep.subr.mxu0 0.0
      %1397 = vmatpush1.msra.mxu0 %v277
      %1398 = vmatprep.subr.mxu0 0.0
      %1399 = vmatpush1.msra.mxu0 %v276
      %1400 = vmatprep.subr.mxu0 0.0
      %1401 = vmatpush1.msra.mxu0 %v275
      %1402 = vmatprep.subr.mxu0 0.0
      %1403 = vmatpush1.msra.mxu0 %v274
      %1404 = vmatprep.subr.mxu0 0.0
      %1405 = vmatpush1.msra.mxu0 %v273
      %1406 = vmatprep.subr.mxu0 0.0
      %1407 = vmatpush2.msra.mxu0 0.0
      %1408 = vmatprep.subr.mxu0 0.0
      %1409 = vmatpush2.msra.mxu0 0.0
      %1410 = vmatprep.subr.mxu0 0.0
      %1411 = vmatpush2.msra.mxu0 0.0
      %1412 = vmatprep.subr.mxu0 0.0
      %1413 = vmatpush2.msra.mxu0 0.0
      %1414 = vmatprep.subr.mxu0 0.0
      %1415 = vmatpush2.msra.mxu0 0.0
      %1416 = vmatprep.subr.mxu0 0.0
      %1417 = vmatpush2.msra.mxu0 0.0
      %1418 = vmatprep.subr.mxu0 0.0
      %1419 = vmatpush2.msra.mxu0 0.0
      %1420 = vmatprep.subr.mxu0 0.0
      %1421 = vmatpush2.msra.mxu0 0.0
      %1422 = vmatprep.subr.mxu0 0.0
      %1423 = vmatpush2.msra.mxu0 0.0
      %1424 = vmatprep.subr.mxu0 0.0
      %1425 = vmatpush2.msra.mxu0 0.0
      %1426 = vmatprep.subr.mxu0 0.0
      %1427 = vmatpush2.msra.mxu0 0.0
      %1428 = vmatprep.subr.mxu0 0.0
      %1429 = vmatpush2.msra.mxu0 0.0
      %1430 = vmatprep.subr.mxu0 0.0
      %1431 = vmatpush2.msra.mxu0 0.0
      %1432 = vmatprep.subr.mxu0 0.0
      %1433 = vmatpush2.msra.mxu0 0.0
      %1434 = vmatprep.subr.mxu0 0.0
      %1435 = vmatpush2.msra.mxu0 0.0
      %1436 = vmatprep.subr.mxu0 0.0
      %1437 = vmatpush2.msra.mxu0 0.0
      %1438 = vmatprep.mubr.f32.mxu0 0.0
      %1439 = vmatmul.mubr.f32.gmra.mxu0 %v1364
      %v1440 = vpop.f32.mrf.mxu0
      %v1441 = vadd.f32 %v1372, %v1440
      %v1442 = vpop.f32.mrf.mxu0
      %1443 = vmatprep.mubr.f32.mxu0 0.0
      %1444 = vmatmul.mubr.f32.gmra.mxu0 %v1365
      %v1445 = vpop.f32.mrf.mxu0
      %v1446 = vadd.f32 %v1372, %v1445
      %v1447 = vpop.f32.mrf.mxu0
      %1448 = vmatprep.mubr.f32.mxu0 0.0
      %1449 = vmatmul.mubr.f32.gmra.mxu0 %v1366
      %v1450 = vpop.f32.mrf.mxu0
      %v1451 = vadd.f32 %v1372, %v1450
      %v1452 = vpop.f32.mrf.mxu0
      %1453 = vmatprep.mubr.f32.mxu0 0.0
      %1454 = vmatmul.mubr.f32.gmra.mxu0 %v1367
      %v1455 = vpop.f32.mrf.mxu0
      %v1456 = vadd.f32 %v1372, %v1455
      %v1457 = vpop.f32.mrf.mxu0
      %1458 = vdwg.mxu0
      %v1459 = vxor.u32 %v1441, 2147483648
      %v1460 = vxor.u32 %v1446, 2147483648
      %v1461 = vxor.u32 %v1451, 2147483648
      %v1462 = vxor.u32 %v1456, 2147483648
      %v1463 = vmul.f32 %v1459, 1.442695
      %v1464 = vpow.pop %v1463
      %v1465 = vmul.f32 %v1460, 1.442695
      %v1466 = vpow.pop %v1465
      %v1467 = vmul.f32 %v1461, 1.442695
      %v1468 = vpow.pop %v1467
      %v1469 = vmul.f32 %v1462, 1.442695
      %v1470 = vpow.pop %v1469
      %v1471 = vadd.f32 %v1464, 1.0
      %v1472 = vadd.f32 %v1466, 1.0
      %v1473 = vadd.f32 %v1468, 1.0
      %v1474 = vadd.f32 %v1470, 1.0
      %v1475 = vrcp.pop %v1471
      %v1476 = vmul.f32 1.0, %v1475
      %v1477 = vrcp.pop %v1472
      %v1478 = vmul.f32 1.0, %v1477
      %v1479 = vrcp.pop %v1473
      %v1480 = vmul.f32 1.0, %v1479
      %v1481 = vrcp.pop %v1474
      %v1482 = vmul.f32 1.0, %v1481
      %v1484 = vlaneseq
      %v1485 = vshrl.u32 %v1484, 7
      %v1486 = vsub.s32 0, %v1485
      %v1487 = vrot.slane %v306, %v1486
      %1489 = vmatprep.subr.mxu0 0.0
      %1490 = vmatpush1.msra.mxu0 %v305
      %1491 = vmatprep.subr.mxu0 0.0
      %1492 = vmatpush1.msra.mxu0 %v304
      %1493 = vmatprep.subr.mxu0 0.0
      %1494 = vmatpush1.msra.mxu0 %v303
      %1495 = vmatprep.subr.mxu0 0.0
      %1496 = vmatpush1.msra.mxu0 %v302
      %1497 = vmatprep.subr.mxu0 0.0
      %1498 = vmatpush1.msra.mxu0 %v301
      %1499 = vmatprep.subr.mxu0 0.0
      %1500 = vmatpush1.msra.mxu0 %v300
      %1501 = vmatprep.subr.mxu0 0.0
      %1502 = vmatpush1.msra.mxu0 %v299
      %1503 = vmatprep.subr.mxu0 0.0
      %1504 = vmatpush1.msra.mxu0 %v298
      %1505 = vmatprep.subr.mxu0 0.0
      %1506 = vmatpush1.msra.mxu0 %v297
      %1507 = vmatprep.subr.mxu0 0.0
      %1508 = vmatpush1.msra.mxu0 %v296
      %1509 = vmatprep.subr.mxu0 0.0
      %1510 = vmatpush1.msra.mxu0 %v295
      %1511 = vmatprep.subr.mxu0 0.0
      %1512 = vmatpush1.msra.mxu0 %v294
      %1513 = vmatprep.subr.mxu0 0.0
      %1514 = vmatpush1.msra.mxu0 %v293
      %1515 = vmatprep.subr.mxu0 0.0
      %1516 = vmatpush1.msra.mxu0 %v292
      %1517 = vmatprep.subr.mxu0 0.0
      %1518 = vmatpush1.msra.mxu0 %v291
      %1519 = vmatprep.subr.mxu0 0.0
      %1520 = vmatpush1.msra.mxu0 %v290
      %1521 = vmatprep.subr.mxu0 0.0
      %1522 = vmatpush2.msra.mxu0 0.0
      %1523 = vmatprep.subr.mxu0 0.0
      %1524 = vmatpush2.msra.mxu0 0.0
      %1525 = vmatprep.subr.mxu0 0.0
      %1526 = vmatpush2.msra.mxu0 0.0
      %1527 = vmatprep.subr.mxu0 0.0
      %1528 = vmatpush2.msra.mxu0 0.0
      %1529 = vmatprep.subr.mxu0 0.0
      %1530 = vmatpush2.msra.mxu0 0.0
      %1531 = vmatprep.subr.mxu0 0.0
      %1532 = vmatpush2.msra.mxu0 0.0
      %1533 = vmatprep.subr.mxu0 0.0
      %1534 = vmatpush2.msra.mxu0 0.0
      %1535 = vmatprep.subr.mxu0 0.0
      %1536 = vmatpush2.msra.mxu0 0.0
      %1537 = vmatprep.subr.mxu0 0.0
      %1538 = vmatpush2.msra.mxu0 0.0
      %1539 = vmatprep.subr.mxu0 0.0
      %1540 = vmatpush2.msra.mxu0 0.0
      %1541 = vmatprep.subr.mxu0 0.0
      %1542 = vmatpush2.msra.mxu0 0.0
      %1543 = vmatprep.subr.mxu0 0.0
      %1544 = vmatpush2.msra.mxu0 0.0
      %1545 = vmatprep.subr.mxu0 0.0
      %1546 = vmatpush2.msra.mxu0 0.0
      %1547 = vmatprep.subr.mxu0 0.0
      %1548 = vmatpush2.msra.mxu0 0.0
      %1549 = vmatprep.subr.mxu0 0.0
      %1550 = vmatpush2.msra.mxu0 0.0
      %1551 = vmatprep.subr.mxu0 0.0
      %1552 = vmatpush2.msra.mxu0 0.0
      %1553 = vmatprep.mubr.f32.mxu0 0.0
      %1554 = vmatmul.mubr.f32.gmra.mxu0 %v1364
      %v1555 = vpop.f32.mrf.mxu0
      %v1556 = vadd.f32 %v1487, %v1555
      %v1557 = vpop.f32.mrf.mxu0
      %1558 = vmatprep.mubr.f32.mxu0 0.0
      %1559 = vmatmul.mubr.f32.gmra.mxu0 %v1365
      %v1560 = vpop.f32.mrf.mxu0
      %v1561 = vadd.f32 %v1487, %v1560
      %v1562 = vpop.f32.mrf.mxu0
      %1563 = vmatprep.mubr.f32.mxu0 0.0
      %1564 = vmatmul.mubr.f32.gmra.mxu0 %v1366
      %v1565 = vpop.f32.mrf.mxu0
      %v1566 = vadd.f32 %v1487, %v1565
      %v1567 = vpop.f32.mrf.mxu0
      %1568 = vmatprep.mubr.f32.mxu0 0.0
      %1569 = vmatmul.mubr.f32.gmra.mxu0 %v1367
      %v1570 = vpop.f32.mrf.mxu0
      %v1571 = vadd.f32 %v1487, %v1570
      %v1572 = vpop.f32.mrf.mxu0
      %1573 = vdwg.mxu0
      %1578 = vrot.lane.b32.xlu0 %v1556, 64
      %v1579 = vpop.permute.xlu0 %1578
      %1580 = vrot.lane.b32.xlu0 %v1561, 64
      %v1581 = vpop.permute.xlu0 %1580
      %1582 = vrot.lane.b32.xlu0 %v1566, 64
      %v1583 = vpop.permute.xlu0 %1582
      %1584 = vrot.lane.b32.xlu0 %v1571, 64
      %v1585 = vpop.permute.xlu0 %1584
      %v1590 = vmul.f32 %v1476, %v1579
      %v1591 = vmul.f32 %v1478, %v1581
      %v1592 = vmul.f32 %v1480, %v1583
      %v1593 = vmul.f32 %v1482, %v1585
      %v1594 = vadd.f32 %v1556, %v1590
      %v1595 = vadd.f32 %v1561, %v1591
      %v1596 = vadd.f32 %v1566, %v1592
      %v1597 = vadd.f32 %v1571, %v1593
      %v1598 = vtanh.pop %v1594
      %v1599 = vtanh.pop %v1595
      %v1600 = vtanh.pop %v1596
      %v1601 = vtanh.pop %v1597
      %v1602 = vsub.f32 1.0, %v1476
      %v1603 = vsub.f32 1.0, %v1478
      %v1604 = vsub.f32 1.0, %v1480
      %v1605 = vsub.f32 1.0, %v1482
      %1610 = vrot.lane.b32.xlu0 %v1598, 64
      %v1611 = vpop.permute.xlu0 %1610
      %1612 = vrot.lane.b32.xlu0 %v1599, 64
      %v1613 = vpop.permute.xlu0 %1612
      %1614 = vrot.lane.b32.xlu0 %v1600, 64
      %v1615 = vpop.permute.xlu0 %1614
      %1616 = vrot.lane.b32.xlu0 %v1601, 64
      %v1617 = vpop.permute.xlu0 %1616
      %v1622 = vmul.f32 %v1602, %v1611
      %v1623 = vmul.f32 %v1603, %v1613
      %v1624 = vmul.f32 %v1604, %v1615
      %v1625 = vmul.f32 %v1605, %v1617
      %v1626 = vmul.f32 %v1476, %v1353
      %v1627 = vmul.f32 %v1478, %v1355
      %v1628 = vmul.f32 %v1480, %v1357
      %v1629 = vmul.f32 %v1482, %v1359
      %v1630 = vadd.f32 %v1622, %v1626
      %v1631 = vadd.f32 %v1623, %v1627
      %v1632 = vadd.f32 %v1624, %v1628
      %v1633 = vadd.f32 %v1625, %v1629
      %1638 = vrot.lane.b32.xlu0 %v1630, 64
      %v1639 = vpop.permute.xlu0 %1638
      %1640 = vrot.lane.b32.xlu0 %v1631, 64
      %v1641 = vpop.permute.xlu0 %1640
      %1642 = vrot.lane.b32.xlu0 %v1632, 64
      %v1643 = vpop.permute.xlu0 %1642
      %1644 = vrot.lane.b32.xlu0 %v1633, 64
      %v1645 = vpop.permute.xlu0 %1644
    $region90: #{tpu_custom_call.1} parent=1 // loop_footer
      %s312 = sadd.s32 1, %s308
    $region91: #{tpu_custom_call.1} parent=1 // loop_footer_branch
      %307 = sbr.rel target = $region87
    $region92: #{tpu_custom_call.1} parent=1 // loop_exit
      _
    %1654 = vrot.lane.b32.xlu0 %v313, 64
    %v1655 = vpop.permute.xlu0 %1654
    %1656 = vrot.lane.b32.xlu0 %v314, 64
    %v1657 = vpop.permute.xlu0 %1656
    %1658 = vrot.lane.b32.xlu0 %v315, 64
    %v1659 = vpop.permute.xlu0 %1658
    %1660 = vrot.lane.b32.xlu0 %v316, 64
    %v1661 = vpop.permute.xlu0 %1660
    %vm1666 = vcmask 523264
    %v1667 = vsel %vm1666, %v224, %v1655
    %v1668 = vsel %vm1666, %v225, %v1657
    %v1669 = vsel %vm1666, %v226, %v1659
    %v1670 = vsel %vm1666, %v227, %v1661
    %v1671 = vld [vmem:[%s4] sm:$0xf]
    %v1672 = vld [vmem:[%s5] sm:$0xf]
    %v1673 = vld [vmem:[%s5 + $0x4] sm:$0xf]
    %v1674 = vld [vmem:[%s5 + $0x8] sm:$0xf]
    %v1675 = vld [vmem:[%s5 + $0xc] sm:$0xf]
    %v1676 = vunpack.c.l.bf16 %v1672
    %v1677 = vunpack.c.l.bf16 %v1673
    %v1678 = vunpack.c.l.bf16 %v1674
    %v1679 = vunpack.c.l.bf16 %v1675
    %vm1680 = vcmp.gt.f32.partialorder %v1676, 0.0
    %vm1681 = vcmp.gt.f32.partialorder %v1677, 0.0
    %vm1682 = vcmp.gt.f32.partialorder %v1678, 0.0
    %vm1683 = vcmp.gt.f32.partialorder %v1679, 0.0
    %v1684 = vld [vmem:[#allocation7] sm:$0xff]
    %v1685 = vld [vmem:[#allocation7 + $0x8] sm:$0xff]
    %v1686 = vld [vmem:[#allocation7 + $0x10] sm:$0xff]
    %v1687 = vld [vmem:[#allocation7 + $0x18] sm:$0xff]
    %v1688 = vld [vmem:[#allocation7 + $0x20] sm:$0xff]
    %v1689 = vld [vmem:[#allocation7 + $0x28] sm:$0xff]
    %v1690 = vld [vmem:[#allocation7 + $0x30] sm:$0xff]
    %v1691 = vld [vmem:[#allocation7 + $0x38] sm:$0xff]
    %v1692 = vld [vmem:[#allocation7 + $0x40] sm:$0xff]
    %v1693 = vld [vmem:[#allocation7 + $0x48] sm:$0xff]
    %v1694 = vld [vmem:[#allocation7 + $0x50] sm:$0xff]
    %v1695 = vld [vmem:[#allocation7 + $0x58] sm:$0xff]
    %v1696 = vld [vmem:[#allocation7 + $0x60] sm:$0xff]
    %v1697 = vld [vmem:[#allocation7 + $0x68] sm:$0xff]
    %v1698 = vld [vmem:[#allocation7 + $0x70] sm:$0xff]
    %v1699 = vld [vmem:[#allocation7 + $0x78] sm:$0xff]
    %v1700 = vld [vmem:[#allocation7 + $0x80] sm:$0xff]
    %v1701 = vld [vmem:[#allocation7 + $0x88] sm:$0xff]
    %v1702 = vld [vmem:[#allocation7 + $0x90] sm:$0xff]
    %v1703 = vld [vmem:[#allocation7 + $0x98] sm:$0xff]
    %v1704 = vld [vmem:[#allocation7 + $0xa0] sm:$0xff]
    %v1705 = vld [vmem:[#allocation7 + $0xa8] sm:$0xff]
    %v1706 = vld [vmem:[#allocation7 + $0xb0] sm:$0xff]
    %v1707 = vld [vmem:[#allocation7 + $0xb8] sm:$0xff]
    %v1708 = vld [vmem:[#allocation7 + $0xc0] sm:$0xff]
    %v1709 = vld [vmem:[#allocation7 + $0xc8] sm:$0xff]
    %v1710 = vld [vmem:[#allocation7 + $0xd0] sm:$0xff]
    %v1711 = vld [vmem:[#allocation7 + $0xd8] sm:$0xff]
    %v1712 = vld [vmem:[#allocation7 + $0xe0] sm:$0xff]
    %v1713 = vld [vmem:[#allocation7 + $0xe8] sm:$0xff]
    %v1714 = vld [vmem:[#allocation7 + $0xf0] sm:$0xff]
    %v1715 = vld [vmem:[#allocation7 + $0xf8] sm:$0xff]
    %v1716 = vld [vmem:[#allocation7 + $0x100] sm:$0xff]
    %v1717 = vld [vmem:[#allocation7 + $0x108] sm:$0xff]
    %v1718 = vld [vmem:[#allocation7 + $0x110] sm:$0xff]
    %v1719 = vld [vmem:[#allocation7 + $0x118] sm:$0xff]
    %v1720 = vld [vmem:[#allocation7 + $0x120] sm:$0xff]
    %v1721 = vld [vmem:[#allocation7 + $0x128] sm:$0xff]
    %v1722 = vld [vmem:[#allocation7 + $0x130] sm:$0xff]
    %v1723 = vld [vmem:[#allocation7 + $0x138] sm:$0xff]
    %v1724 = vld [vmem:[#allocation7 + $0x140] sm:$0xff]
    %v1725 = vld [vmem:[#allocation7 + $0x148] sm:$0xff]
    %v1726 = vld [vmem:[#allocation7 + $0x150] sm:$0xff]
    %v1727 = vld [vmem:[#allocation7 + $0x158] sm:$0xff]
    %v1728 = vld [vmem:[#allocation7 + $0x160] sm:$0xff]
    %v1729 = vld [vmem:[#allocation7 + $0x168] sm:$0xff]
    %v1730 = vld [vmem:[#allocation7 + $0x170] sm:$0xff]
    %v1731 = vld [vmem:[#allocation7 + $0x178] sm:$0xff]
    %v1732 = vld [vmem:[#allocation7 + $0x180] sm:$0xff]
    %v1733 = vld [vmem:[#allocation7 + $0x188] sm:$0xff]
    %v1734 = vld [vmem:[#allocation7 + $0x190] sm:$0xff]
    %v1735 = vld [vmem:[#allocation7 + $0x198] sm:$0xff]
    %v1736 = vld [vmem:[#allocation7 + $0x1a0] sm:$0xff]
    %v1737 = vld [vmem:[#allocation7 + $0x1a8] sm:$0xff]
    %v1738 = vld [vmem:[#allocation7 + $0x1b0] sm:$0xff]
    %v1739 = vld [vmem:[#allocation7 + $0x1b8] sm:$0xff]
    %v1740 = vld [vmem:[#allocation7 + $0x1c0] sm:$0xff]
    %v1741 = vld [vmem:[#allocation7 + $0x1c8] sm:$0xff]
    %v1742 = vld [vmem:[#allocation7 + $0x1d0] sm:$0xff]
    %v1743 = vld [vmem:[#allocation7 + $0x1d8] sm:$0xff]
    %v1744 = vld [vmem:[#allocation7 + $0x1e0] sm:$0xff]
    %v1745 = vld [vmem:[#allocation7 + $0x1e8] sm:$0xff]
    %v1746 = vld [vmem:[#allocation7 + $0x1f0] sm:$0xff]
    %v1747 = vld [vmem:[#allocation7 + $0x1f8] sm:$0xff]
    %v1748 = vld [vmem:[#allocation7 + $0x200] sm:$0xff]
    %v1749 = vld [vmem:[#allocation7 + $0x208] sm:$0xff]
    %v1750 = vld [vmem:[#allocation7 + $0x210] sm:$0xff]
    %v1751 = vld [vmem:[#allocation7 + $0x218] sm:$0xff]
    %v1752 = vld [vmem:[#allocation7 + $0x220] sm:$0xff]
    %v1753 = vld [vmem:[#allocation7 + $0x228] sm:$0xff]
    %v1754 = vld [vmem:[#allocation7 + $0x230] sm:$0xff]
    %v1755 = vld [vmem:[#allocation7 + $0x238] sm:$0xff]
    %v1756 = vld [vmem:[#allocation7 + $0x240] sm:$0xff]
    %v1757 = vld [vmem:[#allocation7 + $0x248] sm:$0xff]
    %v1758 = vld [vmem:[#allocation7 + $0x250] sm:$0xff]
    %v1759 = vld [vmem:[#allocation7 + $0x258] sm:$0xff]
    %v1760 = vld [vmem:[#allocation7 + $0x260] sm:$0xff]
    %v1761 = vld [vmem:[#allocation7 + $0x268] sm:$0xff]
    %v1762 = vld [vmem:[#allocation7 + $0x270] sm:$0xff]
    %v1763 = vld [vmem:[#allocation7 + $0x278] sm:$0xff]
    %v1764 = vld [vmem:[#allocation7 + $0x280] sm:$0xff]
    %v1765 = vld [vmem:[#allocation7 + $0x288] sm:$0xff]
    %v1766 = vld [vmem:[#allocation7 + $0x290] sm:$0xff]
    %v1767 = vld [vmem:[#allocation7 + $0x298] sm:$0xff]
    %v1768 = vld [vmem:[#allocation7 + $0x2a0] sm:$0xff]
    %v1769 = vld [vmem:[#allocation7 + $0x2a8] sm:$0xff]
    %v1770 = vld [vmem:[#allocation7 + $0x2b0] sm:$0xff]
    %v1771 = vld [vmem:[#allocation7 + $0x2b8] sm:$0xff]
    %v1772 = vld [vmem:[#allocation7 + $0x2c0] sm:$0xff]
    %v1773 = vld [vmem:[#allocation7 + $0x2c8] sm:$0xff]
    %v1774 = vld [vmem:[#allocation7 + $0x2d0] sm:$0xff]
    %v1775 = vld [vmem:[#allocation7 + $0x2d8] sm:$0xff]
    %v1776 = vld [vmem:[#allocation7 + $0x2e0] sm:$0xff]
    %v1777 = vld [vmem:[#allocation7 + $0x2e8] sm:$0xff]
    %v1778 = vld [vmem:[#allocation7 + $0x2f0] sm:$0xff]
    %v1779 = vld [vmem:[#allocation7 + $0x2f8] sm:$0xff]
    %v1780 = vld [vmem:[#allocation7 + $0x300] sm:$0xff]
    %v1781 = vld [vmem:[#allocation7 + $0x308] sm:$0xff]
    %v1782 = vld [vmem:[#allocation7 + $0x310] sm:$0xff]
    %v1783 = vld [vmem:[#allocation7 + $0x318] sm:$0xff]
    %v1784 = vld [vmem:[#allocation7 + $0x320] sm:$0xff]
    %v1785 = vld [vmem:[#allocation7 + $0x328] sm:$0xff]
    %v1786 = vld [vmem:[#allocation7 + $0x330] sm:$0xff]
    %v1787 = vld [vmem:[#allocation7 + $0x338] sm:$0xff]
    %v1788 = vld [vmem:[#allocation7 + $0x340] sm:$0xff]
    %v1789 = vld [vmem:[#allocation7 + $0x348] sm:$0xff]
    %v1790 = vld [vmem:[#allocation7 + $0x350] sm:$0xff]
    %v1791 = vld [vmem:[#allocation7 + $0x358] sm:$0xff]
    %v1792 = vld [vmem:[#allocation7 + $0x360] sm:$0xff]
    %v1793 = vld [vmem:[#allocation7 + $0x368] sm:$0xff]
    %v1794 = vld [vmem:[#allocation7 + $0x370] sm:$0xff]
    %v1795 = vld [vmem:[#allocation7 + $0x378] sm:$0xff]
    %v1796 = vld [vmem:[#allocation7 + $0x380] sm:$0xff]
    %v1797 = vld [vmem:[#allocation7 + $0x388] sm:$0xff]
    %v1798 = vld [vmem:[#allocation7 + $0x390] sm:$0xff]
    %v1799 = vld [vmem:[#allocation7 + $0x398] sm:$0xff]
    %v1800 = vld [vmem:[#allocation7 + $0x3a0] sm:$0xff]
    %v1801 = vld [vmem:[#allocation7 + $0x3a8] sm:$0xff]
    %v1802 = vld [vmem:[#allocation7 + $0x3b0] sm:$0xff]
    %v1803 = vld [vmem:[#allocation7 + $0x3b8] sm:$0xff]
    %v1804 = vld [vmem:[#allocation7 + $0x3c0] sm:$0xff]
    %v1805 = vld [vmem:[#allocation7 + $0x3c8] sm:$0xff]
    %v1806 = vld [vmem:[#allocation7 + $0x3d0] sm:$0xff]
    %v1807 = vld [vmem:[#allocation7 + $0x3d8] sm:$0xff]
    %v1808 = vld [vmem:[#allocation7 + $0x3e0] sm:$0xff]
    %v1809 = vld [vmem:[#allocation7 + $0x3e8] sm:$0xff]
    %v1810 = vld [vmem:[#allocation7 + $0x3f0] sm:$0xff]
    %v1811 = vld [vmem:[#allocation7 + $0x3f8] sm:$0xff]
    %v1812 = vld [vmem:[#allocation8] sm:$0xff]
    %v1813 = vld [vmem:[#allocation8 + $0x8] sm:$0xff]
    %v1814 = vld [vmem:[#allocation8 + $0x10] sm:$0xff]
    %v1815 = vld [vmem:[#allocation8 + $0x18] sm:$0xff]
    %v1816 = vld [vmem:[#allocation8 + $0x20] sm:$0xff]
    %v1817 = vld [vmem:[#allocation8 + $0x28] sm:$0xff]
    %v1818 = vld [vmem:[#allocation8 + $0x30] sm:$0xff]
    %v1819 = vld [vmem:[#allocation8 + $0x38] sm:$0xff]
    %v1820 = vld [vmem:[#allocation8 + $0x40] sm:$0xff]
    %v1821 = vld [vmem:[#allocation8 + $0x48] sm:$0xff]
    %v1822 = vld [vmem:[#allocation8 + $0x50] sm:$0xff]
    %v1823 = vld [vmem:[#allocation8 + $0x58] sm:$0xff]
    %v1824 = vld [vmem:[#allocation8 + $0x60] sm:$0xff]
    %v1825 = vld [vmem:[#allocation8 + $0x68] sm:$0xff]
    %v1826 = vld [vmem:[#allocation8 + $0x70] sm:$0xff]
    %v1827 = vld [vmem:[#allocation8 + $0x78] sm:$0xff]
    %v1828 = vld [vmem:[#allocation8 + $0x80] sm:$0xff]
    %v1829 = vld [vmem:[#allocation8 + $0x88] sm:$0xff]
    %v1830 = vld [vmem:[#allocation8 + $0x90] sm:$0xff]
    %v1831 = vld [vmem:[#allocation8 + $0x98] sm:$0xff]
    %v1832 = vld [vmem:[#allocation8 + $0xa0] sm:$0xff]
    %v1833 = vld [vmem:[#allocation8 + $0xa8] sm:$0xff]
    %v1834 = vld [vmem:[#allocation8 + $0xb0] sm:$0xff]
    %v1835 = vld [vmem:[#allocation8 + $0xb8] sm:$0xff]
    %v1836 = vld [vmem:[#allocation8 + $0xc0] sm:$0xff]
    %v1837 = vld [vmem:[#allocation8 + $0xc8] sm:$0xff]
    %v1838 = vld [vmem:[#allocation8 + $0xd0] sm:$0xff]
    %v1839 = vld [vmem:[#allocation8 + $0xd8] sm:$0xff]
    %v1840 = vld [vmem:[#allocation8 + $0xe0] sm:$0xff]
    %v1841 = vld [vmem:[#allocation8 + $0xe8] sm:$0xff]
    %v1842 = vld [vmem:[#allocation8 + $0xf0] sm:$0xff]
    %v1843 = vld [vmem:[#allocation8 + $0xf8] sm:$0xff]
    %v1844 = vld [vmem:[#allocation8 + $0x100] sm:$0xff]
    %v1845 = vld [vmem:[#allocation8 + $0x108] sm:$0xff]
    %v1846 = vld [vmem:[#allocation8 + $0x110] sm:$0xff]
    %v1847 = vld [vmem:[#allocation8 + $0x118] sm:$0xff]
    %v1848 = vld [vmem:[#allocation8 + $0x120] sm:$0xff]
    %v1849 = vld [vmem:[#allocation8 + $0x128] sm:$0xff]
    %v1850 = vld [vmem:[#allocation8 + $0x130] sm:$0xff]
    %v1851 = vld [vmem:[#allocation8 + $0x138] sm:$0xff]
    %v1852 = vld [vmem:[#allocation8 + $0x140] sm:$0xff]
    %v1853 = vld [vmem:[#allocation8 + $0x148] sm:$0xff]
    %v1854 = vld [vmem:[#allocation8 + $0x150] sm:$0xff]
    %v1855 = vld [vmem:[#allocation8 + $0x158] sm:$0xff]
    %v1856 = vld [vmem:[#allocation8 + $0x160] sm:$0xff]
    %v1857 = vld [vmem:[#allocation8 + $0x168] sm:$0xff]
    %v1858 = vld [vmem:[#allocation8 + $0x170] sm:$0xff]
    %v1859 = vld [vmem:[#allocation8 + $0x178] sm:$0xff]
    %v1860 = vld [vmem:[#allocation8 + $0x180] sm:$0xff]
    %v1861 = vld [vmem:[#allocation8 + $0x188] sm:$0xff]
    %v1862 = vld [vmem:[#allocation8 + $0x190] sm:$0xff]
    %v1863 = vld [vmem:[#allocation8 + $0x198] sm:$0xff]
    %v1864 = vld [vmem:[#allocation8 + $0x1a0] sm:$0xff]
    %v1865 = vld [vmem:[#allocation8 + $0x1a8] sm:$0xff]
    %v1866 = vld [vmem:[#allocation8 + $0x1b0] sm:$0xff]
    %v1867 = vld [vmem:[#allocation8 + $0x1b8] sm:$0xff]
    %v1868 = vld [vmem:[#allocation8 + $0x1c0] sm:$0xff]
    %v1869 = vld [vmem:[#allocation8 + $0x1c8] sm:$0xff]
    %v1870 = vld [vmem:[#allocation8 + $0x1d0] sm:$0xff]
    %v1871 = vld [vmem:[#allocation8 + $0x1d8] sm:$0xff]
    %v1872 = vld [vmem:[#allocation8 + $0x1e0] sm:$0xff]
    %v1873 = vld [vmem:[#allocation8 + $0x1e8] sm:$0xff]
    %v1874 = vld [vmem:[#allocation8 + $0x1f0] sm:$0xff]
    %v1875 = vld [vmem:[#allocation8 + $0x1f8] sm:$0xff]
    %v1876 = vld [vmem:[%s16] sm:$0xf]
    loop: start=0, step=1, limit=3
    $region93: #{tpu_custom_call.1} parent=1 // loop_pre_header
      _
    $region94: #{tpu_custom_call.1} parent=1 // loop_header
      %s1878 = sphi 0, %s1882
      %p1879 = scmp.ge.s32.totalorder %s1878, 3
      %v1883 = vphi 0.0, %v2218
      %v1884 = vphi 0.0, %v2433
      %v1885 = vphi 0.0, %v2216
    $region95: #{tpu_custom_call.1} parent=1 // loop_header_branch
      %1881 = sbr.rel (%p1879) target = $region99
    $region96: #{tpu_custom_call.1} parent=1 // loop_body
      %1886 = vmatprep.subr.mxu0 %v1873
      %1887 = vmatpush1.msra.mxu0 %v1872
      %1888 = vmatprep.subr.mxu0 %v1869
      %1889 = vmatpush1.msra.mxu0 %v1868
      %1890 = vmatprep.subr.mxu0 %v1865
      %1891 = vmatpush1.msra.mxu0 %v1864
      %1892 = vmatprep.subr.mxu0 %v1861
      %1893 = vmatpush1.msra.mxu0 %v1860
      %1894 = vmatprep.subr.mxu0 %v1857
      %1895 = vmatpush1.msra.mxu0 %v1856
      %1896 = vmatprep.subr.mxu0 %v1853
      %1897 = vmatpush1.msra.mxu0 %v1852
      %1898 = vmatprep.subr.mxu0 %v1849
      %1899 = vmatpush1.msra.mxu0 %v1848
      %1900 = vmatprep.subr.mxu0 %v1845
      %1901 = vmatpush1.msra.mxu0 %v1844
      %1902 = vmatprep.subr.mxu0 %v1841
      %1903 = vmatpush1.msra.mxu0 %v1840
      %1904 = vmatprep.subr.mxu0 %v1837
      %1905 = vmatpush1.msra.mxu0 %v1836
      %1906 = vmatprep.subr.mxu0 %v1833
      %1907 = vmatpush1.msra.mxu0 %v1832
      %1908 = vmatprep.subr.mxu0 %v1829
      %1909 = vmatpush1.msra.mxu0 %v1828
      %1910 = vmatprep.subr.mxu0 %v1825
      %1911 = vmatpush1.msra.mxu0 %v1824
      %1912 = vmatprep.subr.mxu0 %v1821
      %1913 = vmatpush1.msra.mxu0 %v1820
      %1914 = vmatprep.subr.mxu0 %v1817
      %1915 = vmatpush1.msra.mxu0 %v1816
      %1916 = vmatprep.subr.mxu0 %v1813
      %1917 = vmatpush1.msra.mxu0 %v1812
      %1918 = vmatprep.subr.mxu0 0.0
      %1919 = vmatpush2.msra.mxu0 0.0
      %1920 = vmatprep.subr.mxu0 0.0
      %1921 = vmatpush2.msra.mxu0 0.0
      %1922 = vmatprep.subr.mxu0 0.0
      %1923 = vmatpush2.msra.mxu0 0.0
      %1924 = vmatprep.subr.mxu0 0.0
      %1925 = vmatpush2.msra.mxu0 0.0
      %1926 = vmatprep.subr.mxu0 0.0
      %1927 = vmatpush2.msra.mxu0 0.0
      %1928 = vmatprep.subr.mxu0 0.0
      %1929 = vmatpush2.msra.mxu0 0.0
      %1930 = vmatprep.subr.mxu0 0.0
      %1931 = vmatpush2.msra.mxu0 0.0
      %1932 = vmatprep.subr.mxu0 0.0
      %1933 = vmatpush2.msra.mxu0 0.0
      %1934 = vmatprep.subr.mxu0 0.0
      %1935 = vmatpush2.msra.mxu0 0.0
      %1936 = vmatprep.subr.mxu0 0.0
      %1937 = vmatpush2.msra.mxu0 0.0
      %1938 = vmatprep.subr.mxu0 0.0
      %1939 = vmatpush2.msra.mxu0 0.0
      %1940 = vmatprep.subr.mxu0 0.0
      %1941 = vmatpush2.msra.mxu0 0.0
      %1942 = vmatprep.subr.mxu0 0.0
      %1943 = vmatpush2.msra.mxu0 0.0
      %1944 = vmatprep.subr.mxu0 0.0
      %1945 = vmatpush2.msra.mxu0 0.0
      %1946 = vmatprep.subr.mxu0 0.0
      %1947 = vmatpush2.msra.mxu0 0.0
      %1948 = vmatprep.subr.mxu0 0.0
      %1949 = vmatpush2.msra.mxu0 0.0
      %1950 = vmatprep.mubr.f32.mxu0 0.0
      %1951 = vmatmul.mubr.f32.gmra.mxu0 %v1883
      %v1952 = vpop.f32.mrf.mxu0
      %v1953 = vadd.f32 0.0, %v1952
      %v1954 = vpop.f32.mrf.mxu0
      %v1955 = vadd.f32 0.0, %v1954
      %1956 = vdwg.mxu0
      %1957 = vmatprep.subr.mxu0 %v1875
      %1958 = vmatpush1.msra.mxu0 %v1874
      %1959 = vmatprep.subr.mxu0 %v1871
      %1960 = vmatpush1.msra.mxu0 %v1870
      %1961 = vmatprep.subr.mxu0 %v1867
      %1962 = vmatpush1.msra.mxu0 %v1866
      %1963 = vmatprep.subr.mxu0 %v1863
      %1964 = vmatpush1.msra.mxu0 %v1862
      %1965 = vmatprep.subr.mxu0 %v1859
      %1966 = vmatpush1.msra.mxu0 %v1858
      %1967 = vmatprep.subr.mxu0 %v1855
      %1968 = vmatpush1.msra.mxu0 %v1854
      %1969 = vmatprep.subr.mxu0 %v1851
      %1970 = vmatpush1.msra.mxu0 %v1850
      %1971 = vmatprep.subr.mxu0 %v1847
      %1972 = vmatpush1.msra.mxu0 %v1846
      %1973 = vmatprep.subr.mxu0 %v1843
      %1974 = vmatpush1.msra.mxu0 %v1842
      %1975 = vmatprep.subr.mxu0 %v1839
      %1976 = vmatpush1.msra.mxu0 %v1838
      %1977 = vmatprep.subr.mxu0 %v1835
      %1978 = vmatpush1.msra.mxu0 %v1834
      %1979 = vmatprep.subr.mxu0 %v1831
      %1980 = vmatpush1.msra.mxu0 %v1830
      %1981 = vmatprep.subr.mxu0 %v1827
      %1982 = vmatpush1.msra.mxu0 %v1826
      %1983 = vmatprep.subr.mxu0 %v1823
      %1984 = vmatpush1.msra.mxu0 %v1822
      %1985 = vmatprep.subr.mxu0 %v1819
      %1986 = vmatpush1.msra.mxu0 %v1818
      %1987 = vmatprep.subr.mxu0 %v1815
      %1988 = vmatpush1.msra.mxu0 %v1814
      %1989 = vmatprep.subr.mxu0 0.0
      %1990 = vmatpush2.msra.mxu0 0.0
      %1991 = vmatprep.subr.mxu0 0.0
      %1992 = vmatpush2.msra.mxu0 0.0
      %1993 = vmatprep.subr.mxu0 0.0
      %1994 = vmatpush2.msra.mxu0 0.0
      %1995 = vmatprep.subr.mxu0 0.0
      %1996 = vmatpush2.msra.mxu0 0.0
      %1997 = vmatprep.subr.mxu0 0.0
      %1998 = vmatpush2.msra.mxu0 0.0
      %1999 = vmatprep.subr.mxu0 0.0
      %2000 = vmatpush2.msra.mxu0 0.0
      %2001 = vmatprep.subr.mxu0 0.0
      %2002 = vmatpush2.msra.mxu0 0.0
      %2003 = vmatprep.subr.mxu0 0.0
      %2004 = vmatpush2.msra.mxu0 0.0
      %2005 = vmatprep.subr.mxu0 0.0
      %2006 = vmatpush2.msra.mxu0 0.0
      %2007 = vmatprep.subr.mxu0 0.0
      %2008 = vmatpush2.msra.mxu0 0.0
      %2009 = vmatprep.subr.mxu0 0.0
      %2010 = vmatpush2.msra.mxu0 0.0
      %2011 = vmatprep.subr.mxu0 0.0
      %2012 = vmatpush2.msra.mxu0 0.0
      %2013 = vmatprep.subr.mxu0 0.0
      %2014 = vmatpush2.msra.mxu0 0.0
      %2015 = vmatprep.subr.mxu0 0.0
      %2016 = vmatpush2.msra.mxu0 0.0
      %2017 = vmatprep.subr.mxu0 0.0
      %2018 = vmatpush2.msra.mxu0 0.0
      %2019 = vmatprep.subr.mxu0 0.0
      %2020 = vmatpush2.msra.mxu0 0.0
      %2021 = vmatprep.mubr.f32.mxu0 0.0
      %2022 = vmatmul.mubr.f32.gmra.mxu0 %v1883
      %v2023 = vpop.f32.mrf.mxu0
      %v2024 = vadd.f32 0.0, %v2023
      %v2025 = vpop.f32.mrf.mxu0
      %v2026 = vadd.f32 0.0, %v2025
      %2027 = vdwg.mxu0
      %2028 = vmatprep.subr.mxu0 %v1745
      %2029 = vmatpush1.msra.mxu0 %v1744
      %2030 = vmatprep.subr.mxu0 %v1741
      %2031 = vmatpush1.msra.mxu0 %v1740
      %2032 = vmatprep.subr.mxu0 %v1737
      %2033 = vmatpush1.msra.mxu0 %v1736
      %2034 = vmatprep.subr.mxu0 %v1733
      %2035 = vmatpush1.msra.mxu0 %v1732
      %2036 = vmatprep.subr.mxu0 %v1729
      %2037 = vmatpush1.msra.mxu0 %v1728
      %2038 = vmatprep.subr.mxu0 %v1725
      %2039 = vmatpush1.msra.mxu0 %v1724
      %2040 = vmatprep.subr.mxu0 %v1721
      %2041 = vmatpush1.msra.mxu0 %v1720
      %2042 = vmatprep.subr.mxu0 %v1717
      %2043 = vmatpush1.msra.mxu0 %v1716
      %2044 = vmatprep.subr.mxu0 %v1713
      %2045 = vmatpush1.msra.mxu0 %v1712
      %2046 = vmatprep.subr.mxu0 %v1709
      %2047 = vmatpush1.msra.mxu0 %v1708
      %2048 = vmatprep.subr.mxu0 %v1705
      %2049 = vmatpush1.msra.mxu0 %v1704
      %2050 = vmatprep.subr.mxu0 %v1701
      %2051 = vmatpush1.msra.mxu0 %v1700
      %2052 = vmatprep.subr.mxu0 %v1697
      %2053 = vmatpush1.msra.mxu0 %v1696
      %2054 = vmatprep.subr.mxu0 %v1693
      %2055 = vmatpush1.msra.mxu0 %v1692
      %2056 = vmatprep.subr.mxu0 %v1689
      %2057 = vmatpush1.msra.mxu0 %v1688
      %2058 = vmatprep.subr.mxu0 %v1685
      %2059 = vmatpush1.msra.mxu0 %v1684
      %2060 = vmatprep.subr.mxu0 %v1809
      %2061 = vmatpush2.msra.mxu0 %v1808
      %2062 = vmatprep.subr.mxu0 %v1805
      %2063 = vmatpush2.msra.mxu0 %v1804
      %2064 = vmatprep.subr.mxu0 %v1801
      %2065 = vmatpush2.msra.mxu0 %v1800
      %2066 = vmatprep.subr.mxu0 %v1797
      %2067 = vmatpush2.msra.mxu0 %v1796
      %2068 = vmatprep.subr.mxu0 %v1793
      %2069 = vmatpush2.msra.mxu0 %v1792
      %2070 = vmatprep.subr.mxu0 %v1789
      %2071 = vmatpush2.msra.mxu0 %v1788
      %2072 = vmatprep.subr.mxu0 %v1785
      %2073 = vmatpush2.msra.mxu0 %v1784
      %2074 = vmatprep.subr.mxu0 %v1781
      %2075 = vmatpush2.msra.mxu0 %v1780
      %2076 = vmatprep.subr.mxu0 %v1777
      %2077 = vmatpush2.msra.mxu0 %v1776
      %2078 = vmatprep.subr.mxu0 %v1773
      %2079 = vmatpush2.msra.mxu0 %v1772
      %2080 = vmatprep.subr.mxu0 %v1769
      %2081 = vmatpush2.msra.mxu0 %v1768
      %2082 = vmatprep.subr.mxu0 %v1765
      %2083 = vmatpush2.msra.mxu0 %v1764
      %2084 = vmatprep.subr.mxu0 %v1761
      %2085 = vmatpush2.msra.mxu0 %v1760
      %2086 = vmatprep.subr.mxu0 %v1757
      %2087 = vmatpush2.msra.mxu0 %v1756
      %2088 = vmatprep.subr.mxu0 %v1753
      %2089 = vmatpush2.msra.mxu0 %v1752
      %2090 = vmatprep.subr.mxu0 %v1749
      %2091 = vmatpush2.msra.mxu0 %v1748
      %2092 = vmatprep.mubr.f32.mxu0 %v1884
      %2093 = vmatmul.mubr.f32.gmra.mxu0 %v1883
      %v2094 = vpop.f32.mrf.mxu0
      %v2095 = vadd.f32 %v1953, %v2094
      %v2096 = vpop.f32.mrf.mxu0
      %v2097 = vadd.f32 %v1955, %v2096
      %2098 = vdwg.mxu0
      %2099 = vmatprep.subr.mxu0 %v1747
      %2100 = vmatpush1.msra.mxu0 %v1746
      %2101 = vmatprep.subr.mxu0 %v1743
      %2102 = vmatpush1.msra.mxu0 %v1742
      %2103 = vmatprep.subr.mxu0 %v1739
      %2104 = vmatpush1.msra.mxu0 %v1738
      %2105 = vmatprep.subr.mxu0 %v1735
      %2106 = vmatpush1.msra.mxu0 %v1734
      %2107 = vmatprep.subr.mxu0 %v1731
      %2108 = vmatpush1.msra.mxu0 %v1730
      %2109 = vmatprep.subr.mxu0 %v1727
      %2110 = vmatpush1.msra.mxu0 %v1726
      %2111 = vmatprep.subr.mxu0 %v1723
      %2112 = vmatpush1.msra.mxu0 %v1722
      %2113 = vmatprep.subr.mxu0 %v1719
      %2114 = vmatpush1.msra.mxu0 %v1718
      %2115 = vmatprep.subr.mxu0 %v1715
      %2116 = vmatpush1.msra.mxu0 %v1714
      %2117 = vmatprep.subr.mxu0 %v1711
      %2118 = vmatpush1.msra.mxu0 %v1710
      %2119 = vmatprep.subr.mxu0 %v1707
      %2120 = vmatpush1.msra.mxu0 %v1706
      %2121 = vmatprep.subr.mxu0 %v1703
      %2122 = vmatpush1.msra.mxu0 %v1702
      %2123 = vmatprep.subr.mxu0 %v1699
      %2124 = vmatpush1.msra.mxu0 %v1698
      %2125 = vmatprep.subr.mxu0 %v1695
      %2126 = vmatpush1.msra.mxu0 %v1694
      %2127 = vmatprep.subr.mxu0 %v1691
      %2128 = vmatpush1.msra.mxu0 %v1690
      %2129 = vmatprep.subr.mxu0 %v1687
      %2130 = vmatpush1.msra.mxu0 %v1686
      %2131 = vmatprep.subr.mxu0 %v1811
      %2132 = vmatpush2.msra.mxu0 %v1810
      %2133 = vmatprep.subr.mxu0 %v1807
      %2134 = vmatpush2.msra.mxu0 %v1806
      %2135 = vmatprep.subr.mxu0 %v1803
      %2136 = vmatpush2.msra.mxu0 %v1802
      %2137 = vmatprep.subr.mxu0 %v1799
      %2138 = vmatpush2.msra.mxu0 %v1798
      %2139 = vmatprep.subr.mxu0 %v1795
      %2140 = vmatpush2.msra.mxu0 %v1794
      %2141 = vmatprep.subr.mxu0 %v1791
      %2142 = vmatpush2.msra.mxu0 %v1790
      %2143 = vmatprep.subr.mxu0 %v1787
      %2144 = vmatpush2.msra.mxu0 %v1786
      %2145 = vmatprep.subr.mxu0 %v1783
      %2146 = vmatpush2.msra.mxu0 %v1782
      %2147 = vmatprep.subr.mxu0 %v1779
      %2148 = vmatpush2.msra.mxu0 %v1778
      %2149 = vmatprep.subr.mxu0 %v1775
      %2150 = vmatpush2.msra.mxu0 %v1774
      %2151 = vmatprep.subr.mxu0 %v1771
      %2152 = vmatpush2.msra.mxu0 %v1770
      %2153 = vmatprep.subr.mxu0 %v1767
      %2154 = vmatpush2.msra.mxu0 %v1766
      %2155 = vmatprep.subr.mxu0 %v1763
      %2156 = vmatpush2.msra.mxu0 %v1762
      %2157 = vmatprep.subr.mxu0 %v1759
      %2158 = vmatpush2.msra.mxu0 %v1758
      %2159 = vmatprep.subr.mxu0 %v1755
      %2160 = vmatpush2.msra.mxu0 %v1754
      %2161 = vmatprep.subr.mxu0 %v1751
      %2162 = vmatpush2.msra.mxu0 %v1750
      %2163 = vmatprep.mubr.f32.mxu0 %v1884
      %2164 = vmatmul.mubr.f32.gmra.mxu0 %v1883
      %v2165 = vpop.f32.mrf.mxu0
      %v2166 = vadd.f32 %v2024, %v2165
      %v2167 = vpop.f32.mrf.mxu0
      %v2168 = vadd.f32 %v2026, %v2167
      %2169 = vdwg.mxu0
      %v2171 = vlaneseq
      %v2172 = vshrl.u32 %v2171, 7
      %v2173 = vsub.s32 0, %v2172
      %v2174 = vrot.slane %v1876, %v2173
      %v2175 = vlaneseq
      %v2176 = vshrl.u32 %v2175, 7
      %v2177 = vsub.s32 1, %v2176
      %v2178 = vrot.slane %v1876, %v2177
      %v2179 = vlaneseq
      %v2180 = vshrl.u32 %v2179, 7
      %v2181 = vsub.s32 2, %v2180
      %v2182 = vrot.slane %v1876, %v2181
      %v2183 = vlaneseq
      %v2184 = vshrl.u32 %v2183, 7
      %v2185 = vsub.s32 3, %v2184
      %v2186 = vrot.slane %v1876, %v2185
      %v2191 = vadd.f32 %v2095, %v2174
      %v2192 = vadd.f32 %v2097, %v2178
      %v2193 = vadd.f32 %v2166, %v2182
      %v2194 = vadd.f32 %v2168, %v2186
      %v2195 = vxor.u32 %v2191, 2147483648
      %v2196 = vmul.f32 %v2195, 1.442695
      %v2197 = vpow.pop %v2196
      %v2198 = vadd.f32 %v2197, 1.0
      %v2199 = vrcp.pop %v2198
      %v2200 = vmul.f32 1.0, %v2199
      %v2201 = vxor.u32 %v2192, 2147483648
      %v2202 = vmul.f32 %v2201, 1.442695
      %v2203 = vpow.pop %v2202
      %v2204 = vadd.f32 %v2203, 1.0
      %v2205 = vrcp.pop %v2204
      %v2206 = vmul.f32 1.0, %v2205
      %v2207 = vtanh.pop %v2193
      %v2208 = vxor.u32 %v2194, 2147483648
      %v2209 = vmul.f32 %v2208, 1.442695
      %v2210 = vpow.pop %v2209
      %v2211 = vadd.f32 %v2210, 1.0
      %v2212 = vrcp.pop %v2211
      %v2213 = vmul.f32 1.0, %v2212
      %v2214 = vmul.f32 %v2206, %v1885
      %v2215 = vmul.f32 %v2200, %v2207
      %v2216 = vadd.f32 %v2214, %v2215
      %v2217 = vtanh.pop %v2216
      %v2218 = vmul.f32 %v2213, %v2217
      %v2219 = vpack.c.bf16 %v2218, %v2218
      %v2224 = vunpack.c.l.b16 %v1672
      %v2225 = vunpack.c.l.b16 %v1673
      %v2226 = vunpack.c.l.b16 %v1674
      %v2227 = vunpack.c.l.b16 %v1675
      %v2228 = vpack.c.b16 %v2225, %v2224
      %v2229 = vpack.c.b16 %v2227, %v2226
      %vm2230 = vcmask 64512
      %v2232 = vsel %vm2230, %v2228, 0
      %v2235 = vsel %vm2230, %v2229, 0
      %vm2237 = vcmask 1043456
      %v2239 = vsel %vm2237, %v2219, 0
      %2241 = vmatprep.subr.bf16.mxu0 0
      %2242 = vmatpush1.bf16.msra.mxu0 0
      %2243 = vmatprep.subr.bf16.mxu0 0
      %2244 = vmatpush1.bf16.msra.mxu0 0
      %2245 = vmatprep.subr.bf16.mxu0 0
      %2246 = vmatpush1.bf16.msra.mxu0 0
      %2247 = vmatprep.subr.bf16.mxu0 0
      %2248 = vmatpush1.bf16.msra.mxu0 0
      %2249 = vmatprep.subr.bf16.mxu0 0
      %2250 = vmatpush1.bf16.msra.mxu0 0
      %2251 = vmatprep.subr.bf16.mxu0 0
      %2252 = vmatpush1.bf16.msra.mxu0 0
      %2253 = vmatprep.subr.bf16.mxu0 0
      %2254 = vmatpush1.bf16.msra.mxu0 0
      %2255 = vmatprep.subr.bf16.mxu0 0
      %2256 = vmatpush1.bf16.msra.mxu0 %v2239
      %2257 = vmatprep.subr.bf16.mxu0 0
      %2258 = vmatpush2.bf16.msra.mxu0 0
      %2259 = vmatprep.subr.bf16.mxu0 0
      %2260 = vmatpush2.bf16.msra.mxu0 0
      %2261 = vmatprep.subr.bf16.mxu0 0
      %2262 = vmatpush2.bf16.msra.mxu0 0
      %2263 = vmatprep.subr.bf16.mxu0 0
      %2264 = vmatpush2.bf16.msra.mxu0 0
      %2265 = vmatprep.subr.bf16.mxu0 0
      %2266 = vmatpush2.bf16.msra.mxu0 0
      %2267 = vmatprep.subr.bf16.mxu0 0
      %2268 = vmatpush2.bf16.msra.mxu0 0
      %2269 = vmatprep.subr.bf16.mxu0 0
      %2270 = vmatpush2.bf16.msra.mxu0 0
      %2271 = vmatprep.subr.bf16.mxu0 0
      %2272 = vmatpush2.bf16.msra.mxu0 0
      %2273 = vmatprep.mubr.bf16.mxu0 0
      %2274 = vmatmul.mubr.bf16.gmra.mxu0 %v2232
      %v2275 = vpop.f32.mrf.mxu0
      %v2276 = vadd.f32 0.0, %v2275
      %v2277 = vpop.f32.mrf.mxu0
      %v2278 = vpop.f32.mrf.mxu0
      %v2279 = vadd.f32 0.0, %v2278
      %v2280 = vpop.f32.mrf.mxu0
      %2281 = vmatprep.mubr.bf16.mxu0 0
      %2282 = vmatmul.mubr.bf16.gmra.mxu0 %v2235
      %v2283 = vpop.f32.mrf.mxu0
      %v2284 = vadd.f32 0.0, %v2283
      %v2285 = vpop.f32.mrf.mxu0
      %v2286 = vpop.f32.mrf.mxu0
      %v2287 = vadd.f32 0.0, %v2286
      %v2288 = vpop.f32.mrf.mxu0
      %2289 = vdwg.mxu0
      %v2290 = vmul.f32 %v1667, %v2276
      %v2291 = vmul.f32 %v1668, %v2279
      %v2292 = vmul.f32 %v1669, %v2284
      %v2293 = vmul.f32 %v1670, %v2287
      %2294 = vadd.xlane.f32.xlu0 %v2290
      %v2295 = vpop.xlane.xlu0 %2294
      %2296 = vadd.xlane.f32.xlu0 %v2291
      %v2297 = vpop.xlane.xlu0 %2296
      %2298 = vadd.xlane.f32.xlu0 %v2292
      %v2299 = vpop.xlane.xlu0 %2298
      %2300 = vadd.xlane.f32.xlu0 %v2293
      %v2301 = vpop.xlane.xlu0 %2300
      %v2302 = vsel %vm1680, %v2295, -1e+30
      %v2303 = vsel %vm1681, %v2297, -1e+30
      %v2304 = vsel %vm1682, %v2299, -1e+30
      %v2305 = vsel %vm1683, %v2301, -1e+30
      %v2306 = vsel %vm2230, %v2302, -inf
      %v2307 = vsel %vm2230, %v2303, -inf
      %v2308 = vsel %vm2230, %v2304, -inf
      %v2309 = vsel %vm2230, %v2305, -inf
      %v2310 = vmax.f32 %v2306, %v2307
      %v2311 = vmax.f32 %v2308, %v2309
      %v2312 = vmax.f32 %v2310, %v2311
      %v2313 = vrot.slane %v2312, 4
      %v2314 = vmax.f32 %v2312, %v2313
      %v2315 = vrot.slane %v2314, 2
      %v2316 = vmax.f32 %v2314, %v2315
      %v2317 = vrot.slane %v2316, 1
      %v2318 = vmax.f32 %v2316, %v2317
      %v2319 = vmul.f32 %v1676, %v2318
      %v2320 = vmul.f32 %v1677, %v2318
      %v2321 = vmul.f32 %v1678, %v2318
      %v2322 = vmul.f32 %v1679, %v2318
      %v2323 = vsel %vm2230, %v2319, 0.0
      %2324 = vadd.xlane.f32.xlu0 %v2323
      %v2325 = vpop.xlane.xlu0 %2324
      %v2326 = vsel %vm2230, %v2320, 0.0
      %2327 = vadd.xlane.f32.xlu0 %v2326
      %v2328 = vpop.xlane.xlu0 %2327
      %v2329 = vsel %vm2230, %v2321, 0.0
      %2330 = vadd.xlane.f32.xlu0 %v2329
      %v2331 = vpop.xlane.xlu0 %2330
      %v2332 = vsel %vm2230, %v2322, 0.0
      %2333 = vadd.xlane.f32.xlu0 %v2332
      %v2334 = vpop.xlane.xlu0 %2333
      %v2335 = vsub.f32 %v2295, %v2325
      %v2336 = vsub.f32 %v2297, %v2328
      %v2337 = vsub.f32 %v2299, %v2331
      %v2338 = vsub.f32 %v2301, %v2334
      %v2339 = vmul.f32 %v2335, 1.442695
      %v2340 = vpow.pop %v2339
      %v2341 = vmul.f32 %v2336, 1.442695
      %v2342 = vpow.pop %v2341
      %v2343 = vmul.f32 %v2337, 1.442695
      %v2344 = vpow.pop %v2343
      %v2345 = vmul.f32 %v2338, 1.442695
      %v2346 = vpow.pop %v2345
      %v2347 = vmul.f32 %v1676, %v2340
      %v2348 = vmul.f32 %v1677, %v2342
      %v2349 = vmul.f32 %v1678, %v2344
      %v2350 = vmul.f32 %v1679, %v2346
      %v2351 = vsel %vm2230, %v2347, 0.0
      %v2352 = vsel %vm2230, %v2348, 0.0
      %v2353 = vadd.f32 %v2351, %v2352
      %v2354 = vsel %vm2230, %v2349, 0.0
      %v2355 = vadd.f32 %v2353, %v2354
      %v2356 = vsel %vm2230, %v2350, 0.0
      %v2357 = vadd.f32 %v2355, %v2356
      %v2358 = vrot.slane %v2357, 4
      %v2359 = vadd.f32 %v2357, %v2358
      %v2360 = vrot.slane %v2359, 2
      %v2361 = vadd.f32 %v2359, %v2360
      %v2362 = vrot.slane %v2361, 1
      %v2363 = vadd.f32 %v2361, %v2362
      %v2364 = vmul.f32 %v1676, %v2363
      %v2365 = vmul.f32 %v1677, %v2363
      %v2366 = vmul.f32 %v1678, %v2363
      %v2367 = vmul.f32 %v1679, %v2363
      %v2368 = vsel %vm2230, %v2364, 0.0
      %2369 = vadd.xlane.f32.xlu0 %v2368
      %v2370 = vpop.xlane.xlu0 %2369
      %v2371 = vsel %vm2230, %v2365, 0.0
      %2372 = vadd.xlane.f32.xlu0 %v2371
      %v2373 = vpop.xlane.xlu0 %2372
      %v2374 = vsel %vm2230, %v2366, 0.0
      %2375 = vadd.xlane.f32.xlu0 %v2374
      %v2376 = vpop.xlane.xlu0 %2375
      %v2377 = vsel %vm2230, %v2367, 0.0
      %2378 = vadd.xlane.f32.xlu0 %v2377
      %v2379 = vpop.xlane.xlu0 %2378
      %v2380 = vrcp.pop %v2370
      %v2381 = vrcp.pop %v2373
      %v2382 = vrcp.pop %v2376
      %v2383 = vrcp.pop %v2379
      %v2384 = vmul.f32 %v2340, %v2380
      %v2385 = vmul.f32 %v2342, %v2381
      %v2386 = vmul.f32 %v2344, %v2382
      %v2387 = vmul.f32 %v2346, %v2383
      %v2388 = vmul.f32 %v1667, %v2384
      %v2389 = vmul.f32 %v1668, %v2385
      %v2390 = vmul.f32 %v1669, %v2386
      %v2391 = vmul.f32 %v1670, %v2387
      %v2392 = vpack.c.bf16 %v2389, %v2388
      %v2393 = vpack.c.bf16 %v2391, %v2390
      %vm2394 = vcmask 261120
      %v2396 = vsel %vm2394, %v1671, 0
      %2398 = vmatprep.subr.bf16.mxu0 0
      %2399 = vmatpush1.bf16.msra.mxu0 0
      %2400 = vmatprep.subr.bf16.mxu0 0
      %2401 = vmatpush1.bf16.msra.mxu0 0
      %2402 = vmatprep.subr.bf16.mxu0 0
      %2403 = vmatpush1.bf16.msra.mxu0 0
      %2404 = vmatprep.subr.bf16.mxu0 0
      %2405 = vmatpush1.bf16.msra.mxu0 0
      %2406 = vmatprep.subr.bf16.mxu0 0
      %2407 = vmatpush1.bf16.msra.mxu0 0
      %2408 = vmatprep.subr.bf16.mxu0 0
      %2409 = vmatpush1.bf16.msra.mxu0 0
      %2410 = vmatprep.subr.bf16.mxu0 0
      %2411 = vmatpush1.bf16.msra.mxu0 %v2393
      %2412 = vmatprep.subr.bf16.mxu0 0
      %2413 = vmatpush1.bf16.msra.mxu0 %v2392
      %2414 = vmatprep.subr.bf16.mxu0 0
      %2415 = vmatpush2.bf16.msra.mxu0 0
      %2416 = vmatprep.subr.bf16.mxu0 0
      %2417 = vmatpush2.bf16.msra.mxu0 0
      %2418 = vmatprep.subr.bf16.mxu0 0
      %2419 = vmatpush2.bf16.msra.mxu0 0
      %2420 = vmatprep.subr.bf16.mxu0 0
      %2421 = vmatpush2.bf16.msra.mxu0 0
      %2422 = vmatprep.subr.bf16.mxu0 0
      %2423 = vmatpush2.bf16.msra.mxu0 0
      %2424 = vmatprep.subr.bf16.mxu0 0
      %2425 = vmatpush2.bf16.msra.mxu0 0
      %2426 = vmatprep.subr.bf16.mxu0 0
      %2427 = vmatpush2.bf16.msra.mxu0 0
      %2428 = vmatprep.subr.bf16.mxu0 0
      %2429 = vmatpush2.bf16.msra.mxu0 0
      %2430 = vmatprep.mubr.bf16.mxu0 0
      %2431 = vmatmul.mubr.bf16.gmra.mxu0 %v2396
      %v2432 = vpop.f32.mrf.mxu0
      %v2433 = vadd.f32 0.0, %v2432
      %v2434 = vpop.f32.mrf.mxu0
      %v2435 = vpop.f32.mrf.mxu0
      %v2436 = vpop.f32.mrf.mxu0
      %2437 = vdwg.mxu0
    $region97: #{tpu_custom_call.1} parent=1 // loop_footer
      %s1882 = sadd.s32 1, %s1878
    $region98: #{tpu_custom_call.1} parent=1 // loop_footer_branch
      %1877 = sbr.rel target = $region94
    $region99: #{tpu_custom_call.1} parent=1 // loop_exit
      _
    %2438 = vst [vmem:[#allocation10] sm:$0xff] %v1883
    %2439 = vst [vmem:[#allocation10 + $0x8] sm:$0xff] %v1884
    // Predicated region
    $region100: #{tpu_custom_call.1} parent=1 // pred_check
      _
    $region101: #{tpu_custom_call.1} parent=1 // pred_check_branch
      %2441 = sbr.rel (0) target = $region103
    $region102: #{tpu_custom_call.1} parent=1 // pred_region
      %s2443 = ssub.s32 256, 256
      %2444 = vsyncadd [#allocation4], %s2443
      %s2446 = sshll.u32 [#allocation10], 4
      %s2447 = int_to_ptr.vmem [resolvable:$true] %s2446
      %2449 = dma.vmem_to_hbm [thread:$0]  %s2447, 256, %s17, [#allocation4]
    $region103: #{tpu_custom_call.1} parent=1 // pred_fallthru
      _
    // Predicated region
    $region104: #{tpu_custom_call.1} parent=1 // pred_check
      _
    $region105: #{tpu_custom_call.1} parent=1 // pred_check_branch
      %2451 = sbr.rel (0) target = $region107
    $region106: #{tpu_custom_call.1} parent=1 // pred_region
      %2452 = dma.done [#allocation4], 256
    $region107: #{tpu_custom_call.1} parent=1 // pred_fallthru
      _
    %2453 = vsyncpa [#allocation3], 1
    %2454 = vsyncpa [#allocation6], 1
    %2455 = vsyncpa [#allocation9], 1
    %2456 = vsyncpa [#allocation4], 1

</llo_original>
